<compile_context>
chip_gen: v6e
topology: v6e:2x2x1
jax: 0.10.0
libtpu: 0.0.40
codegen_flags: <defaults>
</compile_context>

<pallas_src>
import functools

import jax
import jax.numpy as jnp
from jax.experimental import pallas as pl
from jax.experimental.pallas import tpu as pltpu


def _round_up(a, b):
    return (a + b - 1) // b * b


# ------------------------------- the kernel --------------------------------
def ffn_kernel(x_ref, w1_ref, b1_ref, w2_ref, b2_ref, o_ref, acc_ref):
    # grid = (token_tiles, ff_chunks); ff-chunk axis is the reduction axis.
    j = pl.program_id(1)

    @pl.when(j == 0)
    def _():
        acc_ref[...] = jnp.zeros_like(acc_ref)

    # hidden chunk: (TM, TF) = (TM, D) @ (D, TF)  -- lane-dense MXU tiles
    h = jnp.dot(x_ref[...], w1_ref[...], preferred_element_type=jnp.float32)
    h = jnp.maximum(h + b1_ref[...], 0.0)
    # TODO(synk): nn.Dropout is identity here (eval / deterministic mode).

    # accumulate the partial second matmul: (TM, D) += (TM, TF) @ (TF, D)
    acc_ref[...] += jnp.dot(h, w2_ref[...], preferred_element_type=jnp.float32)

    @pl.when(j == pl.num_programs(1) - 1)
    def _():
        o_ref[...] = (acc_ref[...] + b2_ref[...]).astype(o_ref.dtype)


# ------------------------------- the wrapper --------------------------------
def feed_forward(x, w1, b1, w2, b2, *, block_tokens=128, block_ff=512):
    """y = relu(x @ w1 + b1) @ w2 + b2, with x of shape (..., d_model)."""
    d_model = x.shape[-1]
    d_ff = w1.shape[-1]
    assert w1.shape == (d_model, d_ff)
    assert w2.shape == (d_ff, d_model)

    b1 = b1.reshape(1, d_ff)
    b2 = b2.reshape(1, d_model)

    lead_shape = x.shape[:-1]
    xm = x.reshape(-1, d_model)
    m = xm.shape[0]

    # Token tile: multiple of 8 sublanes; pad M up so the grid divides evenly.
    tm = min(block_tokens, _round_up(m, 8))
    m_pad = _round_up(m, tm)
    if m_pad != m:
        xm = jnp.pad(xm, ((0, m_pad - m), (0, 0)))

    # d_ff chunk: multiple of 128 lanes, or the whole hidden dim.
    if d_ff % block_ff == 0:
        tf = block_ff
    elif d_ff % 256 == 0:
        tf = 256
    elif d_ff % 128 == 0:
        tf = 128
    else:
        tf = d_ff

    grid = (m_pad // tm, d_ff // tf)

    # Explicit scoped-VMEM budget: double-buffered inputs/output + f32 acc,
    # with headroom; clamped so it also fits v7x's 64 MiB physical VMEM.
    per_buf_elems = (tm * d_model          # x tile
                     + d_model * tf        # w1 chunk
                     + tf                  # b1 chunk
                     + tf * d_model        # w2 chunk
                     + d_model             # b2
                     + tm * d_model)       # out tile
    vmem_bytes = 4 * (2 * per_buf_elems + tm * d_model)  # +acc scratch
    vmem_limit = int(min(64 * 1024 * 1024, max(16 * 1024 * 1024, 4 * vmem_bytes)))

    out = pl.pallas_call(
        ffn_kernel,
        out_shape=jax.ShapeDtypeStruct((m_pad, d_model), x.dtype),
        grid_spec=pltpu.PrefetchScalarGridSpec(
            num_scalar_prefetch=0,
            grid=grid,
            in_specs=[
                pl.BlockSpec((tm, d_model), lambda i, j: (i, 0)),   # x tile
                pl.BlockSpec((d_model, tf), lambda i, j: (0, j)),   # w1 chunk
                pl.BlockSpec((1, tf), lambda i, j: (0, j)),         # b1 chunk
                pl.BlockSpec((tf, d_model), lambda i, j: (j, 0)),   # w2 chunk
                pl.BlockSpec((1, d_model), lambda i, j: (0, 0)),    # b2
            ],
            out_specs=pl.BlockSpec((tm, d_model), lambda i, j: (i, 0)),
            scratch_shapes=[pltpu.VMEM((tm, d_model), jnp.float32)],
        ),
        compiler_params=pltpu.CompilerParams(
            dimension_semantics=("parallel", "arbitrary"),
            vmem_limit_bytes=vmem_limit,
        ),
    )(xm, w1, b1, w2, b2)

    return out[:m].reshape(*lead_shape, d_model)


# --------------------------- pure-JAX reference -----------------------------
def feed_forward_reference(x, w1, b1, w2, b2):
    h = jnp.maximum(x @ w1 + b1.reshape(1, -1), 0.0)
    return h @ w2 + b2.reshape(1, -1)


# ---------------------------------- main ------------------------------------
if __name__ == "__main__":
    B, S, D_MODEL, D_FF = 2, 128, 128, 1024  # lane/sublane-aligned toy shapes

    key = jax.random.PRNGKey(0)
    k1, k2, k3, k4, k5 = jax.random.split(key, 5)

    x = jax.random.normal(k1, (B, S, D_MODEL), jnp.float32)
    # Weights pre-transposed to (in, out) relative to torch.nn.Linear.
    w1 = (0.1 * jax.random.normal(k2, (D_MODEL, D_FF))).astype(jnp.float32)
    b1 = (0.1 * jax.random.normal(k3, (1, D_FF))).astype(jnp.float32)
    w2 = (0.1 * jax.random.normal(k4, (D_FF, D_MODEL))).astype(jnp.float32)
    b2 = (0.1 * jax.random.normal(k5, (1, D_MODEL))).astype(jnp.float32)

    out = feed_forward(x, w1, b1, w2, b2)
    out = jax.block_until_ready(out)

    ref = feed_forward_reference(x, w1, b1, w2, b2)
    assert out.shape == (B, S, D_MODEL)
    assert jnp.allclose(out, ref, rtol=2e-4, atol=2e-4), "mismatch vs reference"

    print("KERNEL_OK")
</pallas_src>

<mosaic_0001>
module attributes {stable_mosaic.version = 11 : i64} {
  func.func @ffn_kernel(%arg0: i32, %arg1: i32, %arg2: memref<128x128xf32, #tpu.memory_space<vmem>>, %arg3: memref<128x512xf32, #tpu.memory_space<vmem>>, %arg4: memref<1x512xf32, #tpu.memory_space<vmem>>, %arg5: memref<512x128xf32, #tpu.memory_space<vmem>>, %arg6: memref<1x128xf32, #tpu.memory_space<vmem>>, %arg7: memref<128x128xf32, #tpu.memory_space<vmem>>, %arg8: memref<128x128xf32, #tpu.memory_space<vmem>>) attributes {dimension_semantics = [#tpu.dimension_semantics<parallel>, #tpu.dimension_semantics<arbitrary>], iteration_bounds = array<i64: 2, 2>, scalar_prefetch = 0 : i64, scratch_operands = 1 : i64, tpu.core_type = #tpu.core_type<tc>, window_params = [{transform_indices = @transform_0, window_bounds = array<i64: 128, 128>}, {transform_indices = @transform_1, window_bounds = array<i64: 128, 512>}, {transform_indices = @transform_2, window_bounds = array<i64: 1, 512>}, {transform_indices = @transform_3, window_bounds = array<i64: 512, 128>}, {pipeline_mode = #tpu.pipeline_mode<synchronous>, transform_indices = @transform_4, window_bounds = array<i64: 1, 128>}, {transform_indices = @transform_5, window_bounds = array<i64: 128, 128>}]} {
    %c0_i32 = arith.constant 0 : i32
    %0 = arith.cmpi eq, %arg1, %c0_i32 : i32
    %1 = arith.extui %0 : i1 to i32
    %c0_i32_0 = arith.constant 0 : i32
    %2 = arith.cmpi ne, %1, %c0_i32_0 : i32
    scf.if %2 {
      %cst_15 = arith.constant 0.000000e+00 : f32
      %19 = vector.broadcast %cst_15 : f32 to vector<128x128xf32>
      %c0_16 = arith.constant 0 : index
      %c0_17 = arith.constant 0 : index
      %20 = vector.load %arg8[%c0_16, %c0_17] : memref<128x128xf32, #tpu.memory_space<vmem>>, vector<128x128xf32>
      tpu.vector_store %arg8[%c0_16, %c0_17], %19 {strides = array<i32>} : memref<128x128xf32, #tpu.memory_space<vmem>>, vector<128x128xf32>,
    } else {
    }
    %c0 = arith.constant 0 : index
    %c0_1 = arith.constant 0 : index
    %3 = vector.load %arg2[%c0, %c0_1] : memref<128x128xf32, #tpu.memory_space<vmem>>, vector<128x128xf32>
    %c0_2 = arith.constant 0 : index
    %c0_3 = arith.constant 0 : index
    %4 = vector.load %arg3[%c0_2, %c0_3] : memref<128x512xf32, #tpu.memory_space<vmem>>, vector<128x512xf32>
    %cst = arith.constant dense<0.000000e+00> : vector<128x512xf32>
    %5 = tpu.matmul %3, %4, %cst {dimension_numbers = #tpu.dot_dimension_numbers<[1], [0], [0], [1], [0, 0, 1, 1], [], []>} : vector<128x128xf32>, vector<128x512xf32>, vector<128x512xf32> -> vector<128x512xf32>
    %c0_4 = arith.constant 0 : index
    %c0_5 = arith.constant 0 : index
    %6 = vector.load %arg4[%c0_4, %c0_5] : memref<1x512xf32, #tpu.memory_space<vmem>>, vector<1x512xf32>
    %7 = vector.broadcast %6 : vector<1x512xf32> to vector<128x512xf32>
    %8 = arith.addf %5, %7 : vector<128x512xf32>
    %cst_6 = arith.constant 0.000000e+00 : f32
    %9 = vector.broadcast %cst_6 : f32 to vector<128x512xf32>
    %10 = arith.maximumf %8, %9 : vector<128x512xf32>
    %c0_7 = arith.constant 0 : index
    %c0_8 = arith.constant 0 : index
    %11 = vector.load %arg8[%c0_7, %c0_8] : memref<128x128xf32, #tpu.memory_space<vmem>>, vector<128x128xf32>
    %c0_9 = arith.constant 0 : index
    %c0_10 = arith.constant 0 : index
    %12 = vector.load %arg5[%c0_9, %c0_10] : memref<512x128xf32, #tpu.memory_space<vmem>>, vector<512x128xf32>
    %cst_11 = arith.constant dense<0.000000e+00> : vector<128x128xf32>
    %13 = tpu.matmul %10, %12, %cst_11 {dimension_numbers = #tpu.dot_dimension_numbers<[1], [0], [0], [1], [0, 0, 1, 1], [], []>} : vector<128x512xf32>, vector<512x128xf32>, vector<128x128xf32> -> vector<128x128xf32>
    %14 = arith.addf %11, %13 : vector<128x128xf32>
    %c0_12 = arith.constant 0 : index
    %c0_13 = arith.constant 0 : index
    %15 = vector.load %arg8[%c0_12, %c0_13] : memref<128x128xf32, #tpu.memory_space<vmem>>, vector<128x128xf32>
    tpu.vector_store %arg8[%c0_12, %c0_13], %14 {strides = array<i32>} : memref<128x128xf32, #tpu.memory_space<vmem>>, vector<128x128xf32>,
    %c1_i32 = arith.constant 1 : i32
    %16 = arith.cmpi eq, %arg1, %c1_i32 : i32
    %17 = arith.extui %16 : i1 to i32
    %c0_i32_14 = arith.constant 0 : i32
    %18 = arith.cmpi ne, %17, %c0_i32_14 : i32
    scf.if %18 {
      %c0_15 = arith.constant 0 : index
      %c0_16 = arith.constant 0 : index
      %19 = vector.load %arg8[%c0_15, %c0_16] : memref<128x128xf32, #tpu.memory_space<vmem>>, vector<128x128xf32>
      %c0_17 = arith.constant 0 : index
      %c0_18 = arith.constant 0 : index
      %20 = vector.load %arg6[%c0_17, %c0_18] : memref<1x128xf32, #tpu.memory_space<vmem>>, vector<1x128xf32>
      %21 = vector.broadcast %20 : vector<1x128xf32> to vector<128x128xf32>
      %22 = arith.addf %19, %21 : vector<128x128xf32>
      %c0_19 = arith.constant 0 : index
      %c0_20 = arith.constant 0 : index
      %23 = vector.load %arg7[%c0_19, %c0_20] : memref<128x128xf32, #tpu.memory_space<vmem>>, vector<128x128xf32>
      tpu.vector_store %arg7[%c0_19, %c0_20], %22 {strides = array<i32>} : memref<128x128xf32, #tpu.memory_space<vmem>>, vector<128x128xf32>,
    } else {
    }
    return
  }
  func.func @transform_0(%arg0: i32, %arg1: i32) -> (i32, i32) {
    %c0_i32 = arith.constant 0 : i32
    %c0_i32_0 = arith.constant 0 : i32
    return %arg0, %c0_i32 : i32, i32
  }
  func.func @transform_1(%arg0: i32, %arg1: i32) -> (i32, i32) {
    %c0_i32 = arith.constant 0 : i32
    %c0_i32_0 = arith.constant 0 : i32
    return %c0_i32, %arg1 : i32, i32
  }
  func.func @transform_2(%arg0: i32, %arg1: i32) -> (i32, i32) {
    %c0_i32 = arith.constant 0 : i32
    %c0_i32_0 = arith.constant 0 : i32
    return %c0_i32, %arg1 : i32, i32
  }
  func.func @transform_3(%arg0: i32, %arg1: i32) -> (i32, i32) {
    %c0_i32 = arith.constant 0 : i32
    %c0_i32_0 = arith.constant 0 : i32
    return %arg1, %c0_i32 : i32, i32
  }
  func.func @transform_4(%arg0: i32, %arg1: i32) -> (i32, i32) {
    %c0_i32 = arith.constant 0 : i32
    %c0_i32_0 = arith.constant 0 : i32
    %c0_i32_1 = arith.constant 0 : i32
    return %c0_i32, %c0_i32_0 : i32, i32
  }
  func.func @transform_5(%arg0: i32, %arg1: i32) -> (i32, i32) {
    %c0_i32 = arith.constant 0 : i32
    %c0_i32_0 = arith.constant 0 : i32
    return %arg0, %c0_i32 : i32, i32
  }
}

</mosaic_0001>

<llo_original>
// kernel: tpu_custom_call.1
$region0: #{tpu_custom_call.1}
  #allocation0 [shape = 'u32[]', space=smem, size = 0x4, offset = 0x4, fixed_abs, tag = 'smem constant byte address 0x4 - core index']
  #allocation1 [shape = 'u32[144,128]{1,0:T(1,128)}', space=vmem, size = 0x12000, scoped, tag = 'internal scratch']
  #allocation2 [shape = 'f32[128,128]{1,0:T(8,128)}', space=vmem, size = 0x10000, scoped, tag = 'scratch operand']
  %s0 = inlined_call_operand.hbm [shape: f32[256,128], index: 0, kind: input, shape index: {}]
  %s1 = inlined_call_operand.hbm [shape: f32[128,1024], index: 1, kind: input, shape index: {}]
  %s2 = inlined_call_operand.hbm [shape: f32[1,1024], index: 2, kind: input, shape index: {}]
  %s3 = inlined_call_operand.hbm [shape: f32[1024,128], index: 3, kind: input, shape index: {}]
  %s4 = inlined_call_operand.vmem [shape: f32[1,128], index: 4, kind: input, shape index: {}]
  %s5 = inlined_call_operand.hbm [shape: f32[256,128], index: 5, kind: output, shape index: {}]
  %s6 = sld [smem:[#allocation0]]
  $region77: #{tpu_custom_call.1} parent=0
    _
  %s8 = ssub.s32 1, %s6
  %s9 = scalar_select 0, %s8, %s6
  $region1: #{tpu_custom_call.1} parent=0
    #allocation3 [shape = 'u8[131072]{0}', space=vmem, size = 0x20000, scoped, tag = 'input window, operand 0']
    #allocation4 [shape = 's32[2]{0}', space=sflag, size = 0x8, scoped, tag = 'scoped memory for tpu_custom_call.1']
    #allocation5 [shape = 's32[2]{0}', space=sflag, size = 0x8, scoped, tag = 'scoped memory for tpu_custom_call.1']
    #allocation6 [shape = 'u8[524288]{0}', space=vmem, size = 0x80000, scoped, tag = 'input window, operand 1']
    #allocation7 [shape = 's32[2]{0}', space=sflag, size = 0x8, scoped, tag = 'scoped memory for tpu_custom_call.1']
    #allocation8 [shape = 'u8[4096]{0}', space=vmem, size = 0x1000, scoped, tag = 'input window, operand 2']
    #allocation9 [shape = 'u8[524288]{0}', space=vmem, size = 0x80000, scoped, tag = 'input window, operand 3']
    #allocation10 [shape = 's32[2]{0}', space=sflag, size = 0x8, scoped, tag = 'scoped memory for tpu_custom_call.1']
    #allocation11 [shape = 'u8[131072]{0}', space=vmem, size = 0x20000, scoped, tag = 'output window, operand 0']
    %10 = vsyncpa [#allocation4], 0
    %s11 = scalar_lea.sflag [#allocation4], 1
    %12 = vsyncpa %s11, 0
    %13 = vsyncpa [#allocation7], 0
    %s14 = scalar_lea.sflag [#allocation7], 1
    %15 = vsyncpa %s14, 0
    %16 = vsyncpa [#allocation10], 0
    %s17 = scalar_lea.sflag [#allocation10], 1
    %18 = vsyncpa %s17, 0
    %19 = vsyncpa [#allocation5], 0
    %s20 = scalar_lea.sflag [#allocation5], 1
    %21 = vsyncpa %s20, 0
    loop: start=0, step=1, limit=6
    $region2: #{tpu_custom_call.1} parent=1 // loop_pre_header
      _
    $region3: #{tpu_custom_call.1} parent=1 // loop_header
      %s23 = sphi 0, %s27
      %p24 = scmp.ge.s32.totalorder %s23, 6
      %s30 = sphi 0, %s42
      %s31 = sphi 0, %s38
      %s32 = sphi 0, %s30
      %s33 = sphi 0, %s31
      %s34 = sphi 0, %s32
      %s35 = sphi 0, %s33
      %s45 = sphi 0, %s47
      %s48 = sphi 0, %s45
      %s49 = sphi 0, %s48
      %s65 = sphi 0, %s49
      %s71 = sphi 0, %s73
      %s74 = sphi 0, %s71
      %s75 = sphi 0, %s74
      %s91 = sphi 0, %s75
      %s97 = sphi 0, %s99
      %s100 = sphi 0, %s97
      %s101 = sphi 0, %s100
      %s117 = sphi 0, %s101
      %s123 = sphi 0, %s125
      %s126 = sphi 0, %s123
      %s127 = sphi 0, %s126
      %s143 = sphi 0, %s127
      %s147 = sphi 0, %s147
      %s149 = sphi 0, %s147
      %s150 = sphi 0, %s149
      %s164 = sphi 0, %s150
      %s170 = sphi 0, %s172
      %s173 = sphi 0, %s170
      %s174 = sphi 0, %s173
      %s190 = sphi 0, %s174
    $region4: #{tpu_custom_call.1} parent=1 // loop_header_branch
      %26 = sbr.rel (%p24) target = $region8
    $region5: #{tpu_custom_call.1} parent=1 // loop_body
      %s28 = ssub.s32 %s23, 1
      %s29 = ssub.s32 %s23, 2
      %s36 = sadd.s32 1, %s31
      %p37 = scmp.ge.s32.totalorder %s36, 2
      %s38 = scalar_select %p37, 0, %s36
      %s39 = sadd.s32 1, %s30
      %s40 = scalar_select %p37, %s39, %s30
      %p41 = scmp.ge.s32.totalorder %s40, 2
      %s42 = scalar_select %p41, 0, %s40
      %s43 = ssub.s32 %s30, %s42
      %p44 = scmp.eq.s32.totalorder %s43, 0
      %s46 = sadd.s32 %s45, 1
      %s47 = scalar_select %p44, %s45, %s46
      %p50 = pneg %p44
      %p51 = scmp.eq.s32.totalorder %s23, 3
      %p52 = por %p50, %p51
      %p53 = scmp.ne.s32.totalorder %s45, %s48
      %p54 = scmp.eq.s32.totalorder %s23, 0
      %p55 = por %p53, %p54
      %p56 = scmp.ne.s32.totalorder %s45, %s48
      %p57 = scmp.eq.s32.totalorder %s28, 3
      %p58 = por %p56, %p57
      %p59 = scmp.ne.s32.totalorder %s48, %s49
      %p60 = scmp.eq.s32.totalorder %s28, 0
      %p61 = por %p59, %p60
      %p62 = scmp.ne.s32.totalorder %s48, %s49
      %p63 = scmp.eq.s32.totalorder %s29, 3
      %p64 = por %p62, %p63
      %p66 = scmp.ne.s32.totalorder %s49, %s65
      %p67 = scmp.eq.s32.totalorder %s29, 0
      %p68 = por %p66, %p67
      %s69 = ssub.s32 %s31, %s38
      %p70 = scmp.eq.s32.totalorder %s69, 0
      %s72 = sadd.s32 %s71, 1
      %s73 = scalar_select %p70, %s71, %s72
      %p76 = pneg %p70
      %p77 = scmp.eq.s32.totalorder %s23, 3
      %p78 = por %p76, %p77
      %p79 = scmp.ne.s32.totalorder %s71, %s74
      %p80 = scmp.eq.s32.totalorder %s23, 0
      %p81 = por %p79, %p80
      %p82 = scmp.ne.s32.totalorder %s71, %s74
      %p83 = scmp.eq.s32.totalorder %s28, 3
      %p84 = por %p82, %p83
      %p85 = scmp.ne.s32.totalorder %s74, %s75
      %p86 = scmp.eq.s32.totalorder %s28, 0
      %p87 = por %p85, %p86
      %p88 = scmp.ne.s32.totalorder %s74, %s75
      %p89 = scmp.eq.s32.totalorder %s29, 3
      %p90 = por %p88, %p89
      %p92 = scmp.ne.s32.totalorder %s75, %s91
      %p93 = scmp.eq.s32.totalorder %s29, 0
      %p94 = por %p92, %p93
      %s95 = ssub.s32 %s31, %s38
      %p96 = scmp.eq.s32.totalorder %s95, 0
      %s98 = sadd.s32 %s97, 1
      %s99 = scalar_select %p96, %s97, %s98
      %p102 = pneg %p96
      %p103 = scmp.eq.s32.totalorder %s23, 3
      %p104 = por %p102, %p103
      %p105 = scmp.ne.s32.totalorder %s97, %s100
      %p106 = scmp.eq.s32.totalorder %s23, 0
      %p107 = por %p105, %p106
      %p108 = scmp.ne.s32.totalorder %s97, %s100
      %p109 = scmp.eq.s32.totalorder %s28, 3
      %p110 = por %p108, %p109
      %p111 = scmp.ne.s32.totalorder %s100, %s101
      %p112 = scmp.eq.s32.totalorder %s28, 0
      %p113 = por %p111, %p112
      %p114 = scmp.ne.s32.totalorder %s100, %s101
      %p115 = scmp.eq.s32.totalorder %s29, 3
      %p116 = por %p114, %p115
      %p118 = scmp.ne.s32.totalorder %s101, %s117
      %p119 = scmp.eq.s32.totalorder %s29, 0
      %p120 = por %p118, %p119
      %s121 = ssub.s32 %s31, %s38
      %p122 = scmp.eq.s32.totalorder %s121, 0
      %s124 = sadd.s32 %s123, 1
      %s125 = scalar_select %p122, %s123, %s124
      %p128 = pneg %p122
      %p129 = scmp.eq.s32.totalorder %s23, 3
      %p130 = por %p128, %p129
      %p131 = scmp.ne.s32.totalorder %s123, %s126
      %p132 = scmp.eq.s32.totalorder %s23, 0
      %p133 = por %p131, %p132
      %p134 = scmp.ne.s32.totalorder %s123, %s126
      %p135 = scmp.eq.s32.totalorder %s28, 3
      %p136 = por %p134, %p135
      %p137 = scmp.ne.s32.totalorder %s126, %s127
      %p138 = scmp.eq.s32.totalorder %s28, 0
      %p139 = por %p137, %p138
      %p140 = scmp.ne.s32.totalorder %s126, %s127
      %p141 = scmp.eq.s32.totalorder %s29, 3
      %p142 = por %p140, %p141
      %p144 = scmp.ne.s32.totalorder %s127, %s143
      %p145 = scmp.eq.s32.totalorder %s29, 0
      %p146 = por %p144, %p145
      %s148 = sadd.s32 %s147, 1
      %p151 = scmp.eq.s32.totalorder %s23, 3
      %p152 = scmp.ne.s32.totalorder %s147, %s149
      %p153 = scmp.eq.s32.totalorder %s23, 0
      %p154 = por %p152, %p153
      %p155 = scmp.ne.s32.totalorder %s147, %s149
      %p156 = scmp.eq.s32.totalorder %s28, 3
      %p157 = por %p155, %p156
      %p158 = scmp.ne.s32.totalorder %s149, %s150
      %p159 = scmp.eq.s32.totalorder %s28, 0
      %p160 = por %p158, %p159
      %p161 = scmp.ne.s32.totalorder %s149, %s150
      %p162 = scmp.eq.s32.totalorder %s29, 3
      %p163 = por %p161, %p162
      %p165 = scmp.ne.s32.totalorder %s150, %s164
      %p166 = scmp.eq.s32.totalorder %s29, 0
      %p167 = por %p165, %p166
      %s168 = ssub.s32 %s30, %s42
      %p169 = scmp.eq.s32.totalorder %s168, 0
      %s171 = sadd.s32 %s170, 1
      %s172 = scalar_select %p169, %s170, %s171
      %p175 = pneg %p169
      %p176 = scmp.eq.s32.totalorder %s23, 3
      %p177 = por %p175, %p176
      %p178 = scmp.ne.s32.totalorder %s170, %s173
      %p179 = scmp.eq.s32.totalorder %s23, 0
      %p180 = por %p178, %p179
      %p181 = scmp.ne.s32.totalorder %s170, %s173
      %p182 = scmp.eq.s32.totalorder %s28, 3
      %p183 = por %p181, %p182
      %p184 = scmp.ne.s32.totalorder %s173, %s174
      %p185 = scmp.eq.s32.totalorder %s28, 0
      %p186 = por %p184, %p185
      %p187 = scmp.ne.s32.totalorder %s173, %s174
      %p188 = scmp.eq.s32.totalorder %s29, 3
      %p189 = por %p187, %p188
      %p191 = scmp.ne.s32.totalorder %s174, %s190
      %p192 = scmp.eq.s32.totalorder %s29, 0
      %p193 = por %p191, %p192
      %p194 = scmp.le.s32.totalorder 1, %s23
      %p195 = scmp.lt.s32.totalorder %s23, 5
      %p196 = pnand %p194, %p195
      %p197 = pneg %p196
      // Predicated region
      $region9: #{tpu_custom_call.1} parent=5 // pred_check
        _
      $region10: #{tpu_custom_call.1} parent=5 // pred_check_branch
        %199 = sbr.rel (%p196) target = $region12
      $region11: #{tpu_custom_call.1} parent=5 // pred_region
        %s200 = ssub.s32 %s23, 1
        // Predicated region
        $region13: #{tpu_custom_call.1} parent=11 // pred_check
          %p201 = pneg %p160
        $region14: #{tpu_custom_call.1} parent=11 // pred_check_branch
          %203 = sbr.rel (%p201) target = $region16
        $region15: #{tpu_custom_call.1} parent=11 // pred_region
          _
        $region16: #{tpu_custom_call.1} parent=11 // pred_fallthru
          _
      $region12: #{tpu_custom_call.1} parent=5 // pred_fallthru
        _
      %p204 = scmp.lt.s32.totalorder %s23, 4
      // Predicated region
      $region17: #{tpu_custom_call.1} parent=5 // pred_check
        %p205 = pneg %p204
      $region18: #{tpu_custom_call.1} parent=5 // pred_check_branch
        %207 = sbr.rel (%p205) target = $region20
      $region19: #{tpu_custom_call.1} parent=5 // pred_region
        // Predicated region
        $region21: #{tpu_custom_call.1} parent=19 // pred_check
          %p208 = pneg %p55
        $region22: #{tpu_custom_call.1} parent=19 // pred_check_branch
          %210 = sbr.rel (%p208) target = $region24
        $region23: #{tpu_custom_call.1} parent=19 // pred_region
          %s211 = sand.u32 %s45, 1
          %s212 = scalar_lea.sflag [#allocation4], %s211
          %s213 = sand.u32 %s45, 1
          %s214 = smul.addr %s213, 128
          %s215 = scalar_lea.vmem [#allocation3], %s214
          %s216 = smul.u32 16, %s30
          %s218 = ssub.s32 2048, 2048
          %219 = vsyncadd %s212, %s218
          %s220 = smul.addr %s216, 128
          %s221 = scalar_lea.hbm %s0, %s220
          %s222 = sshll.u32 %s215, 4
          %s223 = int_to_ptr.vmem [resolvable:$true] %s222
          %228 = dma.hbm_to_vmem [thread:$0]  %s221, 2048, %s223, %s212, 128, 128, 8
        $region24: #{tpu_custom_call.1} parent=19 // pred_fallthru
          _
        // Predicated region
        $region25: #{tpu_custom_call.1} parent=19 // pred_check
          %p229 = pneg %p81
        $region26: #{tpu_custom_call.1} parent=19 // pred_check_branch
          %231 = sbr.rel (%p229) target = $region28
        $region27: #{tpu_custom_call.1} parent=19 // pred_region
          %s232 = sand.u32 %s23, 1
          %s233 = scalar_lea.sflag [#allocation7], %s232
          %s234 = sand.u32 %s71, 1
          %s235 = smul.addr %s234, 512
          %s236 = scalar_lea.vmem [#allocation6], %s235
          %s237 = smul.u32 4, %s31
          %s239 = ssub.s32 8192, 8192
          %240 = vsyncadd %s233, %s239
          %s241 = smul.addr %s237, 128
          %s242 = scalar_lea.hbm %s1, %s241
          %s243 = sshll.u32 %s236, 4
          %s244 = int_to_ptr.vmem [resolvable:$true] %s243
          %249 = dma.hbm_to_vmem [thread:$0]  %s242, 8192, %s244, %s233, 1024, 512, 32
        $region28: #{tpu_custom_call.1} parent=19 // pred_fallthru
          _
        // Predicated region
        $region29: #{tpu_custom_call.1} parent=19 // pred_check
          %p250 = pneg %p107
        $region30: #{tpu_custom_call.1} parent=19 // pred_check_branch
          %252 = sbr.rel (%p250) target = $region32
        $region31: #{tpu_custom_call.1} parent=19 // pred_region
          %s253 = sand.u32 %s23, 1
          %s254 = scalar_lea.sflag [#allocation7], %s253
          %s255 = sand.u32 %s97, 1
          %s256 = smul.addr %s255, 4
          %s257 = scalar_lea.vmem [#allocation8], %s256
          %s258 = smul.u32 4, %s31
          %s260 = ssub.s32 64, 64
          %261 = vsyncadd %s254, %s260
          %s262 = smul.addr %s258, 16
          %s263 = scalar_lea.hbm %s2, %s262
          %s265 = sshll.u32 %s257, 4
          %s266 = int_to_ptr.vmem [resolvable:$true] %s265
          %268 = dma.hbm_to_vmem [thread:$0]  %s263, 64, %s266, %s254
        $region32: #{tpu_custom_call.1} parent=19 // pred_fallthru
          _
        // Predicated region
        $region33: #{tpu_custom_call.1} parent=19 // pred_check
          %p269 = pneg %p133
        $region34: #{tpu_custom_call.1} parent=19 // pred_check_branch
          %271 = sbr.rel (%p269) target = $region36
        $region35: #{tpu_custom_call.1} parent=19 // pred_region
          %s272 = sand.u32 %s123, 1
          %s273 = scalar_lea.sflag [#allocation10], %s272
          %s274 = sand.u32 %s123, 1
          %s275 = smul.addr %s274, 512
          %s276 = scalar_lea.vmem [#allocation9], %s275
          %s277 = smul.u32 64, %s31
          %s279 = ssub.s32 8192, 8192
          %280 = vsyncadd %s273, %s279
          %s281 = smul.addr %s277, 128
          %s282 = scalar_lea.hbm %s3, %s281
          %s283 = sshll.u32 %s276, 4
          %s284 = int_to_ptr.vmem [resolvable:$true] %s283
          %289 = dma.hbm_to_vmem [thread:$0]  %s282, 8192, %s284, %s273, 128, 128, 8
        $region36: #{tpu_custom_call.1} parent=19 // pred_fallthru
          _
      $region20: #{tpu_custom_call.1} parent=5 // pred_fallthru
        _
      %p290 = scmp.le.s32.totalorder 1, %s23
      %p291 = scmp.lt.s32.totalorder %s23, 5
      %p292 = pnand %p290, %p291
      %p293 = pneg %p292
      // Predicated region
      $region37: #{tpu_custom_call.1} parent=5 // pred_check
        _
      $region38: #{tpu_custom_call.1} parent=5 // pred_check_branch
        %295 = sbr.rel (%p292) target = $region40
      $region39: #{tpu_custom_call.1} parent=5 // pred_region
        %s296 = ssub.s32 %s23, 1
        %s297 = sand.u32 %s48, 1
        %s298 = scalar_lea.sflag [#allocation4], %s297
        %s299 = sand.u32 %s48, 1
        %s300 = smul.addr %s299, 128
        %s301 = scalar_lea.vmem [#allocation3], %s300
        // Predicated region
        $region41: #{tpu_custom_call.1} parent=39 // pred_check
          %p302 = pneg %p61
        $region42: #{tpu_custom_call.1} parent=39 // pred_check_branch
          %304 = sbr.rel (%p302) target = $region44
        $region43: #{tpu_custom_call.1} parent=39 // pred_region
          %305 = dma.done %s298, 2048
        $region44: #{tpu_custom_call.1} parent=39 // pred_fallthru
          _
        %s306 = sand.u32 %s28, 1
        %s307 = scalar_lea.sflag [#allocation7], %s306
        %s308 = sand.u32 %s74, 1
        %s309 = smul.addr %s308, 512
        %s310 = scalar_lea.vmem [#allocation6], %s309
        // Predicated region
        $region45: #{tpu_custom_call.1} parent=39 // pred_check
          %p311 = pneg %p87
        $region46: #{tpu_custom_call.1} parent=39 // pred_check_branch
          %313 = sbr.rel (%p311) target = $region48
        $region47: #{tpu_custom_call.1} parent=39 // pred_region
          %314 = dma.done %s307, 8192
        $region48: #{tpu_custom_call.1} parent=39 // pred_fallthru
          _
        %s315 = sand.u32 %s28, 1
        %s316 = scalar_lea.sflag [#allocation7], %s315
        %s317 = sand.u32 %s100, 1
        %s318 = smul.addr %s317, 4
        %s319 = scalar_lea.vmem [#allocation8], %s318
        // Predicated region
        $region49: #{tpu_custom_call.1} parent=39 // pred_check
          %p320 = pneg %p113
        $region50: #{tpu_custom_call.1} parent=39 // pred_check_branch
          %322 = sbr.rel (%p320) target = $region52
        $region51: #{tpu_custom_call.1} parent=39 // pred_region
          %323 = dma.done %s316, 64
        $region52: #{tpu_custom_call.1} parent=39 // pred_fallthru
          _
        %s324 = sand.u32 %s126, 1
        %s325 = scalar_lea.sflag [#allocation10], %s324
        %s326 = sand.u32 %s126, 1
        %s327 = smul.addr %s326, 512
        %s328 = scalar_lea.vmem [#allocation9], %s327
        // Predicated region
        $region53: #{tpu_custom_call.1} parent=39 // pred_check
          %p329 = pneg %p139
        $region54: #{tpu_custom_call.1} parent=39 // pred_check_branch
          %331 = sbr.rel (%p329) target = $region56
        $region55: #{tpu_custom_call.1} parent=39 // pred_region
          %332 = dma.done %s325, 8192
        $region56: #{tpu_custom_call.1} parent=39 // pred_fallthru
          _
        %s333 = sand.u32 %s48, 1
        %s334 = scalar_lea.sflag [#allocation4], %s333
        %s335 = sand.u32 %s48, 1
        %s336 = smul.addr %s335, 128
        %s337 = scalar_lea.vmem [#allocation3], %s336
        %p338 = pneg %p61
        %p339 = pneg %p58
        %s340 = sand.u32 %s28, 1
        %s341 = scalar_lea.sflag [#allocation7], %s340
        %s342 = sand.u32 %s74, 1
        %s343 = smul.addr %s342, 512
        %s344 = scalar_lea.vmem [#allocation6], %s343
        %p345 = pneg %p87
        %p346 = pneg %p84
        %s347 = sand.u32 %s28, 1
        %s348 = scalar_lea.sflag [#allocation7], %s347
        %s349 = sand.u32 %s100, 1
        %s350 = smul.addr %s349, 4
        %s351 = scalar_lea.vmem [#allocation8], %s350
        %p352 = pneg %p113
        %p353 = pneg %p110
        %s354 = sand.u32 %s126, 1
        %s355 = scalar_lea.sflag [#allocation10], %s354
        %s356 = sand.u32 %s126, 1
        %s357 = smul.addr %s356, 512
        %s358 = scalar_lea.vmem [#allocation9], %s357
        %p359 = pneg %p139
        %p360 = pneg %p136
        %p361 = pneg %p160
        %p362 = pneg %p157
        %p363 = pneg %p186
        %p364 = pneg %p183
        %s365 = sand.u32 %s173, 1
        %s366 = scalar_lea.sflag [#allocation5], %s365
        %s367 = sand.u32 %s173, 1
        %s368 = smul.addr %s367, 128
        %s369 = scalar_lea.vmem [#allocation11], %s368
        %s370 = smul.u32 16, %s32
        %s371 = smul.u32 4, %s33
        %s372 = smul.u32 4, %s33
        %s373 = smul.u32 64, %s33
        %s374 = smul.u32 16, %s32
        %p375 = scmp.eq.s32.totalorder %s33, 0
        // Predicated region
        $region57: #{tpu_custom_call.1} parent=39 // pred_check
          %p376 = pneg %p375
        $region58: #{tpu_custom_call.1} parent=39 // pred_check_branch
          %378 = sbr.rel (%p376) target = $region60
        $region59: #{tpu_custom_call.1} parent=39 // pred_region
          %379 = vst [vmem:[#allocation2] sm:$0xff] 0.0
          %380 = vst [vmem:[#allocation2 + $0x8] sm:$0xff] 0.0
          %381 = vst [vmem:[#allocation2 + $0x10] sm:$0xff] 0.0
          %382 = vst [vmem:[#allocation2 + $0x18] sm:$0xff] 0.0
          %383 = vst [vmem:[#allocation2 + $0x20] sm:$0xff] 0.0
          %384 = vst [vmem:[#allocation2 + $0x28] sm:$0xff] 0.0
          %385 = vst [vmem:[#allocation2 + $0x30] sm:$0xff] 0.0
          %386 = vst [vmem:[#allocation2 + $0x38] sm:$0xff] 0.0
          %387 = vst [vmem:[#allocation2 + $0x40] sm:$0xff] 0.0
          %388 = vst [vmem:[#allocation2 + $0x48] sm:$0xff] 0.0
          %389 = vst [vmem:[#allocation2 + $0x50] sm:$0xff] 0.0
          %390 = vst [vmem:[#allocation2 + $0x58] sm:$0xff] 0.0
          %391 = vst [vmem:[#allocation2 + $0x60] sm:$0xff] 0.0
          %392 = vst [vmem:[#allocation2 + $0x68] sm:$0xff] 0.0
          %393 = vst [vmem:[#allocation2 + $0x70] sm:$0xff] 0.0
          %394 = vst [vmem:[#allocation2 + $0x78] sm:$0xff] 0.0
        $region60: #{tpu_custom_call.1} parent=39 // pred_fallthru
          _
        %v395 = vld [vmem:[%s301] sm:$0xff]
        %v396 = vld [vmem:[%s301 + $0x8] sm:$0xff]
        %v397 = vld [vmem:[%s301 + $0x10] sm:$0xff]
        %v398 = vld [vmem:[%s301 + $0x18] sm:$0xff]
        %v399 = vld [vmem:[%s301 + $0x20] sm:$0xff]
        %v400 = vld [vmem:[%s301 + $0x28] sm:$0xff]
        %v401 = vld [vmem:[%s301 + $0x30] sm:$0xff]
        %v402 = vld [vmem:[%s301 + $0x38] sm:$0xff]
        %v403 = vld [vmem:[%s301 + $0x40] sm:$0xff]
        %v404 = vld [vmem:[%s301 + $0x48] sm:$0xff]
        %v405 = vld [vmem:[%s301 + $0x50] sm:$0xff]
        %v406 = vld [vmem:[%s301 + $0x58] sm:$0xff]
        %v407 = vld [vmem:[%s301 + $0x60] sm:$0xff]
        %v408 = vld [vmem:[%s301 + $0x68] sm:$0xff]
        %v409 = vld [vmem:[%s301 + $0x70] sm:$0xff]
        %v410 = vld [vmem:[%s301 + $0x78] sm:$0xff]
        %v411 = vld [vmem:[%s310] sm:$0xff]
        %v412 = vld [vmem:[%s310 + $0x8] sm:$0xff]
        %v413 = vld [vmem:[%s310 + $0x10] sm:$0xff]
        %v414 = vld [vmem:[%s310 + $0x18] sm:$0xff]
        %v415 = vld [vmem:[%s310 + $0x20] sm:$0xff]
        %v416 = vld [vmem:[%s310 + $0x28] sm:$0xff]
        %v417 = vld [vmem:[%s310 + $0x30] sm:$0xff]
        %v418 = vld [vmem:[%s310 + $0x38] sm:$0xff]
        %v419 = vld [vmem:[%s310 + $0x40] sm:$0xff]
        %v420 = vld [vmem:[%s310 + $0x48] sm:$0xff]
        %v421 = vld [vmem:[%s310 + $0x50] sm:$0xff]
        %v422 = vld [vmem:[%s310 + $0x58] sm:$0xff]
        %v423 = vld [vmem:[%s310 + $0x60] sm:$0xff]
        %v424 = vld [vmem:[%s310 + $0x68] sm:$0xff]
        %v425 = vld [vmem:[%s310 + $0x70] sm:$0xff]
        %v426 = vld [vmem:[%s310 + $0x78] sm:$0xff]
        %v427 = vld [vmem:[%s310 + $0x80] sm:$0xff]
        %v428 = vld [vmem:[%s310 + $0x88] sm:$0xff]
        %v429 = vld [vmem:[%s310 + $0x90] sm:$0xff]
        %v430 = vld [vmem:[%s310 + $0x98] sm:$0xff]
        %v431 = vld [vmem:[%s310 + $0xa0] sm:$0xff]
        %v432 = vld [vmem:[%s310 + $0xa8] sm:$0xff]
        %v433 = vld [vmem:[%s310 + $0xb0] sm:$0xff]
        %v434 = vld [vmem:[%s310 + $0xb8] sm:$0xff]
        %v435 = vld [vmem:[%s310 + $0xc0] sm:$0xff]
        %v436 = vld [vmem:[%s310 + $0xc8] sm:$0xff]
        %v437 = vld [vmem:[%s310 + $0xd0] sm:$0xff]
        %v438 = vld [vmem:[%s310 + $0xd8] sm:$0xff]
        %v439 = vld [vmem:[%s310 + $0xe0] sm:$0xff]
        %v440 = vld [vmem:[%s310 + $0xe8] sm:$0xff]
        %v441 = vld [vmem:[%s310 + $0xf0] sm:$0xff]
        %v442 = vld [vmem:[%s310 + $0xf8] sm:$0xff]
        %v443 = vld [vmem:[%s310 + $0x100] sm:$0xff]
        %v444 = vld [vmem:[%s310 + $0x108] sm:$0xff]
        %v445 = vld [vmem:[%s310 + $0x110] sm:$0xff]
        %v446 = vld [vmem:[%s310 + $0x118] sm:$0xff]
        %v447 = vld [vmem:[%s310 + $0x120] sm:$0xff]
        %v448 = vld [vmem:[%s310 + $0x128] sm:$0xff]
        %v449 = vld [vmem:[%s310 + $0x130] sm:$0xff]
        %v450 = vld [vmem:[%s310 + $0x138] sm:$0xff]
        %v451 = vld [vmem:[%s310 + $0x140] sm:$0xff]
        %v452 = vld [vmem:[%s310 + $0x148] sm:$0xff]
        %v453 = vld [vmem:[%s310 + $0x150] sm:$0xff]
        %v454 = vld [vmem:[%s310 + $0x158] sm:$0xff]
        %v455 = vld [vmem:[%s310 + $0x160] sm:$0xff]
        %v456 = vld [vmem:[%s310 + $0x168] sm:$0xff]
        %v457 = vld [vmem:[%s310 + $0x170] sm:$0xff]
        %v458 = vld [vmem:[%s310 + $0x178] sm:$0xff]
        %v459 = vld [vmem:[%s310 + $0x180] sm:$0xff]
        %v460 = vld [vmem:[%s310 + $0x188] sm:$0xff]
        %v461 = vld [vmem:[%s310 + $0x190] sm:$0xff]
        %v462 = vld [vmem:[%s310 + $0x198] sm:$0xff]
        %v463 = vld [vmem:[%s310 + $0x1a0] sm:$0xff]
        %v464 = vld [vmem:[%s310 + $0x1a8] sm:$0xff]
        %v465 = vld [vmem:[%s310 + $0x1b0] sm:$0xff]
        %v466 = vld [vmem:[%s310 + $0x1b8] sm:$0xff]
        %v467 = vld [vmem:[%s310 + $0x1c0] sm:$0xff]
        %v468 = vld [vmem:[%s310 + $0x1c8] sm:$0xff]
        %v469 = vld [vmem:[%s310 + $0x1d0] sm:$0xff]
        %v470 = vld [vmem:[%s310 + $0x1d8] sm:$0xff]
        %v471 = vld [vmem:[%s310 + $0x1e0] sm:$0xff]
        %v472 = vld [vmem:[%s310 + $0x1e8] sm:$0xff]
        %v473 = vld [vmem:[%s310 + $0x1f0] sm:$0xff]
        %v474 = vld [vmem:[%s310 + $0x1f8] sm:$0xff]
        %v475 = vld [vmem:[%s319] sm:$0xf]
        %v477 = vlaneseq
        %v478 = vshrl.u32 %v477, 7
        %v479 = vsub.s32 0, %v478
        %v480 = vrot.slane %v475, %v479
        %v481 = vlaneseq
        %v482 = vshrl.u32 %v481, 7
        %v483 = vsub.s32 1, %v482
        %v484 = vrot.slane %v475, %v483
        %v485 = vlaneseq
        %v486 = vshrl.u32 %v485, 7
        %v487 = vsub.s32 2, %v486
        %v488 = vrot.slane %v475, %v487
        %v489 = vlaneseq
        %v490 = vshrl.u32 %v489, 7
        %v491 = vsub.s32 3, %v490
        %v492 = vrot.slane %v475, %v491
        %497 = vmatprep.subr.mxu0 %v472
        %498 = vmatpush1.msra.mxu0 %v471
        %499 = vmatprep.subr.mxu0 %v468
        %500 = vmatpush1.msra.mxu0 %v467
        %501 = vmatprep.subr.mxu0 %v464
        %502 = vmatpush1.msra.mxu0 %v463
        %503 = vmatprep.subr.mxu0 %v460
        %504 = vmatpush1.msra.mxu0 %v459
        %505 = vmatprep.subr.mxu0 %v456
        %506 = vmatpush1.msra.mxu0 %v455
        %507 = vmatprep.subr.mxu0 %v452
        %508 = vmatpush1.msra.mxu0 %v451
        %509 = vmatprep.subr.mxu0 %v448
        %510 = vmatpush1.msra.mxu0 %v447
        %511 = vmatprep.subr.mxu0 %v444
        %512 = vmatpush1.msra.mxu0 %v443
        %513 = vmatprep.subr.mxu0 %v440
        %514 = vmatpush1.msra.mxu0 %v439
        %515 = vmatprep.subr.mxu0 %v436
        %516 = vmatpush1.msra.mxu0 %v435
        %517 = vmatprep.subr.mxu0 %v432
        %518 = vmatpush1.msra.mxu0 %v431
        %519 = vmatprep.subr.mxu0 %v428
        %520 = vmatpush1.msra.mxu0 %v427
        %521 = vmatprep.subr.mxu0 %v424
        %522 = vmatpush1.msra.mxu0 %v423
        %523 = vmatprep.subr.mxu0 %v420
        %524 = vmatpush1.msra.mxu0 %v419
        %525 = vmatprep.subr.mxu0 %v416
        %526 = vmatpush1.msra.mxu0 %v415
        %527 = vmatprep.subr.mxu0 %v412
        %528 = vmatpush1.msra.mxu0 %v411
        %529 = vmatprep.subr.mxu0 0.0
        %530 = vmatpush2.msra.mxu0 0.0
        %531 = vmatprep.subr.mxu0 0.0
        %532 = vmatpush2.msra.mxu0 0.0
        %533 = vmatprep.subr.mxu0 0.0
        %534 = vmatpush2.msra.mxu0 0.0
        %535 = vmatprep.subr.mxu0 0.0
        %536 = vmatpush2.msra.mxu0 0.0
        %537 = vmatprep.subr.mxu0 0.0
        %538 = vmatpush2.msra.mxu0 0.0
        %539 = vmatprep.subr.mxu0 0.0
        %540 = vmatpush2.msra.mxu0 0.0
        %541 = vmatprep.subr.mxu0 0.0
        %542 = vmatpush2.msra.mxu0 0.0
        %543 = vmatprep.subr.mxu0 0.0
        %544 = vmatpush2.msra.mxu0 0.0
        %545 = vmatprep.subr.mxu0 0.0
        %546 = vmatpush2.msra.mxu0 0.0
        %547 = vmatprep.subr.mxu0 0.0
        %548 = vmatpush2.msra.mxu0 0.0
        %549 = vmatprep.subr.mxu0 0.0
        %550 = vmatpush2.msra.mxu0 0.0
        %551 = vmatprep.subr.mxu0 0.0
        %552 = vmatpush2.msra.mxu0 0.0
        %553 = vmatprep.subr.mxu0 0.0
        %554 = vmatpush2.msra.mxu0 0.0
        %555 = vmatprep.subr.mxu0 0.0
        %556 = vmatpush2.msra.mxu0 0.0
        %557 = vmatprep.subr.mxu0 0.0
        %558 = vmatpush2.msra.mxu0 0.0
        %559 = vmatprep.subr.mxu0 0.0
        %560 = vmatpush2.msra.mxu0 0.0
        %561 = vmatprep.mubr.f32.mxu0 0.0
        %562 = vmatmul.mubr.f32.gmra.mxu0 %v395
        %v563 = vpop.f32.mrf.mxu0
        %v564 = vadd.f32 %v480, %v563
        %v565 = vpop.f32.mrf.mxu0
        %v566 = vadd.f32 %v484, %v565
        %567 = vmatprep.mubr.f32.mxu0 0.0
        %568 = vmatmul.mubr.f32.gmra.mxu0 %v396
        %v569 = vpop.f32.mrf.mxu0
        %v570 = vadd.f32 %v480, %v569
        %v571 = vpop.f32.mrf.mxu0
        %v572 = vadd.f32 %v484, %v571
        %573 = vmatprep.mubr.f32.mxu0 0.0
        %574 = vmatmul.mubr.f32.gmra.mxu0 %v397
        %v575 = vpop.f32.mrf.mxu0
        %v576 = vadd.f32 %v480, %v575
        %v577 = vpop.f32.mrf.mxu0
        %v578 = vadd.f32 %v484, %v577
        %579 = vmatprep.mubr.f32.mxu0 0.0
        %580 = vmatmul.mubr.f32.gmra.mxu0 %v398
        %v581 = vpop.f32.mrf.mxu0
        %v582 = vadd.f32 %v480, %v581
        %v583 = vpop.f32.mrf.mxu0
        %v584 = vadd.f32 %v484, %v583
        %585 = vmatprep.mubr.f32.mxu0 0.0
        %586 = vmatmul.mubr.f32.gmra.mxu0 %v399
        %v587 = vpop.f32.mrf.mxu0
        %v588 = vadd.f32 %v480, %v587
        %v589 = vpop.f32.mrf.mxu0
        %v590 = vadd.f32 %v484, %v589
        %591 = vmatprep.mubr.f32.mxu0 0.0
        %592 = vmatmul.mubr.f32.gmra.mxu0 %v400
        %v593 = vpop.f32.mrf.mxu0
        %v594 = vadd.f32 %v480, %v593
        %v595 = vpop.f32.mrf.mxu0
        %v596 = vadd.f32 %v484, %v595
        %597 = vmatprep.mubr.f32.mxu0 0.0
        %598 = vmatmul.mubr.f32.gmra.mxu0 %v401
        %v599 = vpop.f32.mrf.mxu0
        %v600 = vadd.f32 %v480, %v599
        %v601 = vpop.f32.mrf.mxu0
        %v602 = vadd.f32 %v484, %v601
        %603 = vmatprep.mubr.f32.mxu0 0.0
        %604 = vmatmul.mubr.f32.gmra.mxu0 %v402
        %v605 = vpop.f32.mrf.mxu0
        %v606 = vadd.f32 %v480, %v605
        %v607 = vpop.f32.mrf.mxu0
        %v608 = vadd.f32 %v484, %v607
        %609 = vmatprep.mubr.f32.mxu0 0.0
        %610 = vmatmul.mubr.f32.gmra.mxu0 %v403
        %v611 = vpop.f32.mrf.mxu0
        %v612 = vadd.f32 %v480, %v611
        %v613 = vpop.f32.mrf.mxu0
        %v614 = vadd.f32 %v484, %v613
        %615 = vmatprep.mubr.f32.mxu0 0.0
        %616 = vmatmul.mubr.f32.gmra.mxu0 %v404
        %v617 = vpop.f32.mrf.mxu0
        %v618 = vadd.f32 %v480, %v617
        %v619 = vpop.f32.mrf.mxu0
        %v620 = vadd.f32 %v484, %v619
        %621 = vmatprep.mubr.f32.mxu0 0.0
        %622 = vmatmul.mubr.f32.gmra.mxu0 %v405
        %v623 = vpop.f32.mrf.mxu0
        %v624 = vadd.f32 %v480, %v623
        %v625 = vpop.f32.mrf.mxu0
        %v626 = vadd.f32 %v484, %v625
        %627 = vmatprep.mubr.f32.mxu0 0.0
        %628 = vmatmul.mubr.f32.gmra.mxu0 %v406
        %v629 = vpop.f32.mrf.mxu0
        %v630 = vadd.f32 %v480, %v629
        %v631 = vpop.f32.mrf.mxu0
        %v632 = vadd.f32 %v484, %v631
        %633 = vmatprep.mubr.f32.mxu0 0.0
        %634 = vmatmul.mubr.f32.gmra.mxu0 %v407
        %v635 = vpop.f32.mrf.mxu0
        %v636 = vadd.f32 %v480, %v635
        %v637 = vpop.f32.mrf.mxu0
        %v638 = vadd.f32 %v484, %v637
        %639 = vmatprep.mubr.f32.mxu0 0.0
        %640 = vmatmul.mubr.f32.gmra.mxu0 %v408
        %v641 = vpop.f32.mrf.mxu0
        %v642 = vadd.f32 %v480, %v641
        %v643 = vpop.f32.mrf.mxu0
        %v644 = vadd.f32 %v484, %v643
        %645 = vmatprep.mubr.f32.mxu0 0.0
        %646 = vmatmul.mubr.f32.gmra.mxu0 %v409
        %v647 = vpop.f32.mrf.mxu0
        %v648 = vadd.f32 %v480, %v647
        %v649 = vpop.f32.mrf.mxu0
        %v650 = vadd.f32 %v484, %v649
        %651 = vmatprep.mubr.f32.mxu0 0.0
        %652 = vmatmul.mubr.f32.gmra.mxu0 %v410
        %v653 = vpop.f32.mrf.mxu0
        %v654 = vadd.f32 %v480, %v653
        %v655 = vpop.f32.mrf.mxu0
        %v656 = vadd.f32 %v484, %v655
        %657 = vdwg.mxu0
        %658 = vmatprep.subr.mxu0 %v474
        %659 = vmatpush1.msra.mxu0 %v473
        %660 = vmatprep.subr.mxu0 %v470
        %661 = vmatpush1.msra.mxu0 %v469
        %662 = vmatprep.subr.mxu0 %v466
        %663 = vmatpush1.msra.mxu0 %v465
        %664 = vmatprep.subr.mxu0 %v462
        %665 = vmatpush1.msra.mxu0 %v461
        %666 = vmatprep.subr.mxu0 %v458
        %667 = vmatpush1.msra.mxu0 %v457
        %668 = vmatprep.subr.mxu0 %v454
        %669 = vmatpush1.msra.mxu0 %v453
        %670 = vmatprep.subr.mxu0 %v450
        %671 = vmatpush1.msra.mxu0 %v449
        %672 = vmatprep.subr.mxu0 %v446
        %673 = vmatpush1.msra.mxu0 %v445
        %674 = vmatprep.subr.mxu0 %v442
        %675 = vmatpush1.msra.mxu0 %v441
        %676 = vmatprep.subr.mxu0 %v438
        %677 = vmatpush1.msra.mxu0 %v437
        %678 = vmatprep.subr.mxu0 %v434
        %679 = vmatpush1.msra.mxu0 %v433
        %680 = vmatprep.subr.mxu0 %v430
        %681 = vmatpush1.msra.mxu0 %v429
        %682 = vmatprep.subr.mxu0 %v426
        %683 = vmatpush1.msra.mxu0 %v425
        %684 = vmatprep.subr.mxu0 %v422
        %685 = vmatpush1.msra.mxu0 %v421
        %686 = vmatprep.subr.mxu0 %v418
        %687 = vmatpush1.msra.mxu0 %v417
        %688 = vmatprep.subr.mxu0 %v414
        %689 = vmatpush1.msra.mxu0 %v413
        %690 = vmatprep.subr.mxu0 0.0
        %691 = vmatpush2.msra.mxu0 0.0
        %692 = vmatprep.subr.mxu0 0.0
        %693 = vmatpush2.msra.mxu0 0.0
        %694 = vmatprep.subr.mxu0 0.0
        %695 = vmatpush2.msra.mxu0 0.0
        %696 = vmatprep.subr.mxu0 0.0
        %697 = vmatpush2.msra.mxu0 0.0
        %698 = vmatprep.subr.mxu0 0.0
        %699 = vmatpush2.msra.mxu0 0.0
        %700 = vmatprep.subr.mxu0 0.0
        %701 = vmatpush2.msra.mxu0 0.0
        %702 = vmatprep.subr.mxu0 0.0
        %703 = vmatpush2.msra.mxu0 0.0
        %704 = vmatprep.subr.mxu0 0.0
        %705 = vmatpush2.msra.mxu0 0.0
        %706 = vmatprep.subr.mxu0 0.0
        %707 = vmatpush2.msra.mxu0 0.0
        %708 = vmatprep.subr.mxu0 0.0
        %709 = vmatpush2.msra.mxu0 0.0
        %710 = vmatprep.subr.mxu0 0.0
        %711 = vmatpush2.msra.mxu0 0.0
        %712 = vmatprep.subr.mxu0 0.0
        %713 = vmatpush2.msra.mxu0 0.0
        %714 = vmatprep.subr.mxu0 0.0
        %715 = vmatpush2.msra.mxu0 0.0
        %716 = vmatprep.subr.mxu0 0.0
        %717 = vmatpush2.msra.mxu0 0.0
        %718 = vmatprep.subr.mxu0 0.0
        %719 = vmatpush2.msra.mxu0 0.0
        %720 = vmatprep.subr.mxu0 0.0
        %721 = vmatpush2.msra.mxu0 0.0
        %722 = vmatprep.mubr.f32.mxu0 0.0
        %723 = vmatmul.mubr.f32.gmra.mxu0 %v395
        %v724 = vpop.f32.mrf.mxu0
        %v725 = vadd.f32 %v488, %v724
        %v726 = vpop.f32.mrf.mxu0
        %v727 = vadd.f32 %v492, %v726
        %728 = vmatprep.mubr.f32.mxu0 0.0
        %729 = vmatmul.mubr.f32.gmra.mxu0 %v396
        %v730 = vpop.f32.mrf.mxu0
        %v731 = vadd.f32 %v488, %v730
        %v732 = vpop.f32.mrf.mxu0
        %v733 = vadd.f32 %v492, %v732
        %734 = vmatprep.mubr.f32.mxu0 0.0
        %735 = vmatmul.mubr.f32.gmra.mxu0 %v397
        %v736 = vpop.f32.mrf.mxu0
        %v737 = vadd.f32 %v488, %v736
        %v738 = vpop.f32.mrf.mxu0
        %v739 = vadd.f32 %v492, %v738
        %740 = vmatprep.mubr.f32.mxu0 0.0
        %741 = vmatmul.mubr.f32.gmra.mxu0 %v398
        %v742 = vpop.f32.mrf.mxu0
        %v743 = vadd.f32 %v488, %v742
        %v744 = vpop.f32.mrf.mxu0
        %v745 = vadd.f32 %v492, %v744
        %746 = vmatprep.mubr.f32.mxu0 0.0
        %747 = vmatmul.mubr.f32.gmra.mxu0 %v399
        %v748 = vpop.f32.mrf.mxu0
        %v749 = vadd.f32 %v488, %v748
        %v750 = vpop.f32.mrf.mxu0
        %v751 = vadd.f32 %v492, %v750
        %752 = vmatprep.mubr.f32.mxu0 0.0
        %753 = vmatmul.mubr.f32.gmra.mxu0 %v400
        %v754 = vpop.f32.mrf.mxu0
        %v755 = vadd.f32 %v488, %v754
        %v756 = vpop.f32.mrf.mxu0
        %v757 = vadd.f32 %v492, %v756
        %758 = vmatprep.mubr.f32.mxu0 0.0
        %759 = vmatmul.mubr.f32.gmra.mxu0 %v401
        %v760 = vpop.f32.mrf.mxu0
        %v761 = vadd.f32 %v488, %v760
        %v762 = vpop.f32.mrf.mxu0
        %v763 = vadd.f32 %v492, %v762
        %764 = vmatprep.mubr.f32.mxu0 0.0
        %765 = vmatmul.mubr.f32.gmra.mxu0 %v402
        %v766 = vpop.f32.mrf.mxu0
        %v767 = vadd.f32 %v488, %v766
        %v768 = vpop.f32.mrf.mxu0
        %v769 = vadd.f32 %v492, %v768
        %770 = vmatprep.mubr.f32.mxu0 0.0
        %771 = vmatmul.mubr.f32.gmra.mxu0 %v403
        %v772 = vpop.f32.mrf.mxu0
        %v773 = vadd.f32 %v488, %v772
        %v774 = vpop.f32.mrf.mxu0
        %v775 = vadd.f32 %v492, %v774
        %776 = vmatprep.mubr.f32.mxu0 0.0
        %777 = vmatmul.mubr.f32.gmra.mxu0 %v404
        %v778 = vpop.f32.mrf.mxu0
        %v779 = vadd.f32 %v488, %v778
        %v780 = vpop.f32.mrf.mxu0
        %v781 = vadd.f32 %v492, %v780
        %782 = vmatprep.mubr.f32.mxu0 0.0
        %783 = vmatmul.mubr.f32.gmra.mxu0 %v405
        %v784 = vpop.f32.mrf.mxu0
        %v785 = vadd.f32 %v488, %v784
        %v786 = vpop.f32.mrf.mxu0
        %v787 = vadd.f32 %v492, %v786
        %788 = vmatprep.mubr.f32.mxu0 0.0
        %789 = vmatmul.mubr.f32.gmra.mxu0 %v406
        %v790 = vpop.f32.mrf.mxu0
        %v791 = vadd.f32 %v488, %v790
        %v792 = vpop.f32.mrf.mxu0
        %v793 = vadd.f32 %v492, %v792
        %794 = vmatprep.mubr.f32.mxu0 0.0
        %795 = vmatmul.mubr.f32.gmra.mxu0 %v407
        %v796 = vpop.f32.mrf.mxu0
        %v797 = vadd.f32 %v488, %v796
        %v798 = vpop.f32.mrf.mxu0
        %v799 = vadd.f32 %v492, %v798
        %800 = vmatprep.mubr.f32.mxu0 0.0
        %801 = vmatmul.mubr.f32.gmra.mxu0 %v408
        %v802 = vpop.f32.mrf.mxu0
        %v803 = vadd.f32 %v488, %v802
        %v804 = vpop.f32.mrf.mxu0
        %v805 = vadd.f32 %v492, %v804
        %806 = vmatprep.mubr.f32.mxu0 0.0
        %807 = vmatmul.mubr.f32.gmra.mxu0 %v409
        %v808 = vpop.f32.mrf.mxu0
        %v809 = vadd.f32 %v488, %v808
        %v810 = vpop.f32.mrf.mxu0
        %v811 = vadd.f32 %v492, %v810
        %812 = vmatprep.mubr.f32.mxu0 0.0
        %813 = vmatmul.mubr.f32.gmra.mxu0 %v410
        %v814 = vpop.f32.mrf.mxu0
        %v815 = vadd.f32 %v488, %v814
        %v816 = vpop.f32.mrf.mxu0
        %v817 = vadd.f32 %v492, %v816
        %818 = vdwg.mxu0
        %v819 = vmax.f32 %v564, 0.0
        %v820 = vmax.f32 %v566, 0.0
        %v821 = vmax.f32 %v725, 0.0
        %v822 = vmax.f32 %v727, 0.0
        %v823 = vmax.f32 %v570, 0.0
        %v824 = vmax.f32 %v572, 0.0
        %v825 = vmax.f32 %v731, 0.0
        %v826 = vmax.f32 %v733, 0.0
        %v827 = vmax.f32 %v576, 0.0
        %v828 = vmax.f32 %v578, 0.0
        %v829 = vmax.f32 %v737, 0.0
        %v830 = vmax.f32 %v739, 0.0
        %v831 = vmax.f32 %v582, 0.0
        %v832 = vmax.f32 %v584, 0.0
        %v833 = vmax.f32 %v743, 0.0
        %v834 = vmax.f32 %v745, 0.0
        %v835 = vmax.f32 %v588, 0.0
        %v836 = vmax.f32 %v590, 0.0
        %v837 = vmax.f32 %v749, 0.0
        %v838 = vmax.f32 %v751, 0.0
        %v839 = vmax.f32 %v594, 0.0
        %v840 = vmax.f32 %v596, 0.0
        %v841 = vmax.f32 %v755, 0.0
        %v842 = vmax.f32 %v757, 0.0
        %v843 = vmax.f32 %v600, 0.0
        %v844 = vmax.f32 %v602, 0.0
        %v845 = vmax.f32 %v761, 0.0
        %v846 = vmax.f32 %v763, 0.0
        %v847 = vmax.f32 %v606, 0.0
        %v848 = vmax.f32 %v608, 0.0
        %v849 = vmax.f32 %v767, 0.0
        %v850 = vmax.f32 %v769, 0.0
        %v851 = vmax.f32 %v612, 0.0
        %v852 = vmax.f32 %v614, 0.0
        %v853 = vmax.f32 %v773, 0.0
        %v854 = vmax.f32 %v775, 0.0
        %v855 = vmax.f32 %v618, 0.0
        %v856 = vmax.f32 %v620, 0.0
        %v857 = vmax.f32 %v779, 0.0
        %v858 = vmax.f32 %v781, 0.0
        %v859 = vmax.f32 %v624, 0.0
        %v860 = vmax.f32 %v626, 0.0
        %v861 = vmax.f32 %v785, 0.0
        %v862 = vmax.f32 %v787, 0.0
        %v863 = vmax.f32 %v630, 0.0
        %v864 = vmax.f32 %v632, 0.0
        %v865 = vmax.f32 %v791, 0.0
        %v866 = vmax.f32 %v793, 0.0
        %v867 = vmax.f32 %v636, 0.0
        %v868 = vmax.f32 %v638, 0.0
        %v869 = vmax.f32 %v797, 0.0
        %v870 = vmax.f32 %v799, 0.0
        %v871 = vmax.f32 %v642, 0.0
        %v872 = vmax.f32 %v644, 0.0
        %v873 = vmax.f32 %v803, 0.0
        %v874 = vmax.f32 %v805, 0.0
        %v875 = vmax.f32 %v648, 0.0
        %v876 = vmax.f32 %v650, 0.0
        %v877 = vmax.f32 %v809, 0.0
        %v878 = vmax.f32 %v811, 0.0
        %v879 = vmax.f32 %v654, 0.0
        %v880 = vmax.f32 %v656, 0.0
        %v881 = vmax.f32 %v815, 0.0
        %v882 = vmax.f32 %v817, 0.0
        %v883 = vld [vmem:[#allocation2] sm:$0xff]
        %v884 = vld [vmem:[#allocation2 + $0x8] sm:$0xff]
        %v885 = vld [vmem:[#allocation2 + $0x10] sm:$0xff]
        %v886 = vld [vmem:[#allocation2 + $0x18] sm:$0xff]
        %v887 = vld [vmem:[#allocation2 + $0x20] sm:$0xff]
        %v888 = vld [vmem:[#allocation2 + $0x28] sm:$0xff]
        %v889 = vld [vmem:[#allocation2 + $0x30] sm:$0xff]
        %v890 = vld [vmem:[#allocation2 + $0x38] sm:$0xff]
        %v891 = vld [vmem:[#allocation2 + $0x40] sm:$0xff]
        %v892 = vld [vmem:[#allocation2 + $0x48] sm:$0xff]
        %v893 = vld [vmem:[#allocation2 + $0x50] sm:$0xff]
        %v894 = vld [vmem:[#allocation2 + $0x58] sm:$0xff]
        %v895 = vld [vmem:[#allocation2 + $0x60] sm:$0xff]
        %v896 = vld [vmem:[#allocation2 + $0x68] sm:$0xff]
        %v897 = vld [vmem:[#allocation2 + $0x70] sm:$0xff]
        %v898 = vld [vmem:[#allocation2 + $0x78] sm:$0xff]
        %v899 = vld [vmem:[%s328] sm:$0xff]
        %v900 = vld [vmem:[%s328 + $0x8] sm:$0xff]
        %v901 = vld [vmem:[%s328 + $0x10] sm:$0xff]
        %v902 = vld [vmem:[%s328 + $0x18] sm:$0xff]
        %v903 = vld [vmem:[%s328 + $0x20] sm:$0xff]
        %v904 = vld [vmem:[%s328 + $0x28] sm:$0xff]
        %v905 = vld [vmem:[%s328 + $0x30] sm:$0xff]
        %v906 = vld [vmem:[%s328 + $0x38] sm:$0xff]
        %v907 = vld [vmem:[%s328 + $0x40] sm:$0xff]
        %v908 = vld [vmem:[%s328 + $0x48] sm:$0xff]
        %v909 = vld [vmem:[%s328 + $0x50] sm:$0xff]
        %v910 = vld [vmem:[%s328 + $0x58] sm:$0xff]
        %v911 = vld [vmem:[%s328 + $0x60] sm:$0xff]
        %v912 = vld [vmem:[%s328 + $0x68] sm:$0xff]
        %v913 = vld [vmem:[%s328 + $0x70] sm:$0xff]
        %v914 = vld [vmem:[%s328 + $0x78] sm:$0xff]
        %v915 = vld [vmem:[%s328 + $0x80] sm:$0xff]
        %v916 = vld [vmem:[%s328 + $0x88] sm:$0xff]
        %v917 = vld [vmem:[%s328 + $0x90] sm:$0xff]
        %v918 = vld [vmem:[%s328 + $0x98] sm:$0xff]
        %v919 = vld [vmem:[%s328 + $0xa0] sm:$0xff]
        %v920 = vld [vmem:[%s328 + $0xa8] sm:$0xff]
        %v921 = vld [vmem:[%s328 + $0xb0] sm:$0xff]
        %v922 = vld [vmem:[%s328 + $0xb8] sm:$0xff]
        %v923 = vld [vmem:[%s328 + $0xc0] sm:$0xff]
        %v924 = vld [vmem:[%s328 + $0xc8] sm:$0xff]
        %v925 = vld [vmem:[%s328 + $0xd0] sm:$0xff]
        %v926 = vld [vmem:[%s328 + $0xd8] sm:$0xff]
        %v927 = vld [vmem:[%s328 + $0xe0] sm:$0xff]
        %v928 = vld [vmem:[%s328 + $0xe8] sm:$0xff]
        %v929 = vld [vmem:[%s328 + $0xf0] sm:$0xff]
        %v930 = vld [vmem:[%s328 + $0xf8] sm:$0xff]
        %v931 = vld [vmem:[%s328 + $0x100] sm:$0xff]
        %v932 = vld [vmem:[%s328 + $0x108] sm:$0xff]
        %v933 = vld [vmem:[%s328 + $0x110] sm:$0xff]
        %v934 = vld [vmem:[%s328 + $0x118] sm:$0xff]
        %v935 = vld [vmem:[%s328 + $0x120] sm:$0xff]
        %v936 = vld [vmem:[%s328 + $0x128] sm:$0xff]
        %v937 = vld [vmem:[%s328 + $0x130] sm:$0xff]
        %v938 = vld [vmem:[%s328 + $0x138] sm:$0xff]
        %v939 = vld [vmem:[%s328 + $0x140] sm:$0xff]
        %v940 = vld [vmem:[%s328 + $0x148] sm:$0xff]
        %v941 = vld [vmem:[%s328 + $0x150] sm:$0xff]
        %v942 = vld [vmem:[%s328 + $0x158] sm:$0xff]
        %v943 = vld [vmem:[%s328 + $0x160] sm:$0xff]
        %v944 = vld [vmem:[%s328 + $0x168] sm:$0xff]
        %v945 = vld [vmem:[%s328 + $0x170] sm:$0xff]
        %v946 = vld [vmem:[%s328 + $0x178] sm:$0xff]
        %v947 = vld [vmem:[%s328 + $0x180] sm:$0xff]
        %v948 = vld [vmem:[%s328 + $0x188] sm:$0xff]
        %v949 = vld [vmem:[%s328 + $0x190] sm:$0xff]
        %v950 = vld [vmem:[%s328 + $0x198] sm:$0xff]
        %v951 = vld [vmem:[%s328 + $0x1a0] sm:$0xff]
        %v952 = vld [vmem:[%s328 + $0x1a8] sm:$0xff]
        %v953 = vld [vmem:[%s328 + $0x1b0] sm:$0xff]
        %v954 = vld [vmem:[%s328 + $0x1b8] sm:$0xff]
        %v955 = vld [vmem:[%s328 + $0x1c0] sm:$0xff]
        %v956 = vld [vmem:[%s328 + $0x1c8] sm:$0xff]
        %v957 = vld [vmem:[%s328 + $0x1d0] sm:$0xff]
        %v958 = vld [vmem:[%s328 + $0x1d8] sm:$0xff]
        %v959 = vld [vmem:[%s328 + $0x1e0] sm:$0xff]
        %v960 = vld [vmem:[%s328 + $0x1e8] sm:$0xff]
        %v961 = vld [vmem:[%s328 + $0x1f0] sm:$0xff]
        %v962 = vld [vmem:[%s328 + $0x1f8] sm:$0xff]
        %963 = vmatprep.subr.mxu0 0.0
        %964 = vmatpush1.msra.mxu0 %v914
        %965 = vmatprep.subr.mxu0 0.0
        %966 = vmatpush1.msra.mxu0 %v913
        %967 = vmatprep.subr.mxu0 0.0
        %968 = vmatpush1.msra.mxu0 %v912
        %969 = vmatprep.subr.mxu0 0.0
        %970 = vmatpush1.msra.mxu0 %v911
        %971 = vmatprep.subr.mxu0 0.0
        %972 = vmatpush1.msra.mxu0 %v910
        %973 = vmatprep.subr.mxu0 0.0
        %974 = vmatpush1.msra.mxu0 %v909
        %975 = vmatprep.subr.mxu0 0.0
        %976 = vmatpush1.msra.mxu0 %v908
        %977 = vmatprep.subr.mxu0 0.0
        %978 = vmatpush1.msra.mxu0 %v907
        %979 = vmatprep.subr.mxu0 0.0
        %980 = vmatpush1.msra.mxu0 %v906
        %981 = vmatprep.subr.mxu0 0.0
        %982 = vmatpush1.msra.mxu0 %v905
        %983 = vmatprep.subr.mxu0 0.0
        %984 = vmatpush1.msra.mxu0 %v904
        %985 = vmatprep.subr.mxu0 0.0
        %986 = vmatpush1.msra.mxu0 %v903
        %987 = vmatprep.subr.mxu0 0.0
        %988 = vmatpush1.msra.mxu0 %v902
        %989 = vmatprep.subr.mxu0 0.0
        %990 = vmatpush1.msra.mxu0 %v901
        %991 = vmatprep.subr.mxu0 0.0
        %992 = vmatpush1.msra.mxu0 %v900
        %993 = vmatprep.subr.mxu0 0.0
        %994 = vmatpush1.msra.mxu0 %v899
        %995 = vmatprep.subr.mxu0 0.0
        %996 = vmatpush2.msra.mxu0 %v930
        %997 = vmatprep.subr.mxu0 0.0
        %998 = vmatpush2.msra.mxu0 %v929
        %999 = vmatprep.subr.mxu0 0.0
        %1000 = vmatpush2.msra.mxu0 %v928
        %1001 = vmatprep.subr.mxu0 0.0
        %1002 = vmatpush2.msra.mxu0 %v927
        %1003 = vmatprep.subr.mxu0 0.0
        %1004 = vmatpush2.msra.mxu0 %v926
        %1005 = vmatprep.subr.mxu0 0.0
        %1006 = vmatpush2.msra.mxu0 %v925
        %1007 = vmatprep.subr.mxu0 0.0
        %1008 = vmatpush2.msra.mxu0 %v924
        %1009 = vmatprep.subr.mxu0 0.0
        %1010 = vmatpush2.msra.mxu0 %v923
        %1011 = vmatprep.subr.mxu0 0.0
        %1012 = vmatpush2.msra.mxu0 %v922
        %1013 = vmatprep.subr.mxu0 0.0
        %1014 = vmatpush2.msra.mxu0 %v921
        %1015 = vmatprep.subr.mxu0 0.0
        %1016 = vmatpush2.msra.mxu0 %v920
        %1017 = vmatprep.subr.mxu0 0.0
        %1018 = vmatpush2.msra.mxu0 %v919
        %1019 = vmatprep.subr.mxu0 0.0
        %1020 = vmatpush2.msra.mxu0 %v918
        %1021 = vmatprep.subr.mxu0 0.0
        %1022 = vmatpush2.msra.mxu0 %v917
        %1023 = vmatprep.subr.mxu0 0.0
        %1024 = vmatpush2.msra.mxu0 %v916
        %1025 = vmatprep.subr.mxu0 0.0
        %1026 = vmatpush2.msra.mxu0 %v915
        %1027 = vmatprep.mubr.f32.mxu0 %v820
        %1028 = vmatmul.mubr.f32.gmra.mxu0 %v819
        %v1029 = vpop.f32.mrf.mxu0
        %v1030 = vadd.f32 0.0, %v1029
        %v1031 = vpop.f32.mrf.mxu0
        %1032 = vmatprep.mubr.f32.mxu0 %v824
        %1033 = vmatmul.mubr.f32.gmra.mxu0 %v823
        %v1034 = vpop.f32.mrf.mxu0
        %v1035 = vadd.f32 0.0, %v1034
        %v1036 = vpop.f32.mrf.mxu0
        %1037 = vmatprep.mubr.f32.mxu0 %v828
        %1038 = vmatmul.mubr.f32.gmra.mxu0 %v827
        %v1039 = vpop.f32.mrf.mxu0
        %v1040 = vadd.f32 0.0, %v1039
        %v1041 = vpop.f32.mrf.mxu0
        %1042 = vmatprep.mubr.f32.mxu0 %v832
        %1043 = vmatmul.mubr.f32.gmra.mxu0 %v831
        %v1044 = vpop.f32.mrf.mxu0
        %v1045 = vadd.f32 0.0, %v1044
        %v1046 = vpop.f32.mrf.mxu0
        %1047 = vmatprep.mubr.f32.mxu0 %v836
        %1048 = vmatmul.mubr.f32.gmra.mxu0 %v835
        %v1049 = vpop.f32.mrf.mxu0
        %v1050 = vadd.f32 0.0, %v1049
        %v1051 = vpop.f32.mrf.mxu0
        %1052 = vmatprep.mubr.f32.mxu0 %v840
        %1053 = vmatmul.mubr.f32.gmra.mxu0 %v839
        %v1054 = vpop.f32.mrf.mxu0
        %v1055 = vadd.f32 0.0, %v1054
        %v1056 = vpop.f32.mrf.mxu0
        %1057 = vmatprep.mubr.f32.mxu0 %v844
        %1058 = vmatmul.mubr.f32.gmra.mxu0 %v843
        %v1059 = vpop.f32.mrf.mxu0
        %v1060 = vadd.f32 0.0, %v1059
        %v1061 = vpop.f32.mrf.mxu0
        %1062 = vmatprep.mubr.f32.mxu0 %v848
        %1063 = vmatmul.mubr.f32.gmra.mxu0 %v847
        %v1064 = vpop.f32.mrf.mxu0
        %v1065 = vadd.f32 0.0, %v1064
        %v1066 = vpop.f32.mrf.mxu0
        %1067 = vmatprep.mubr.f32.mxu0 %v852
        %1068 = vmatmul.mubr.f32.gmra.mxu0 %v851
        %v1069 = vpop.f32.mrf.mxu0
        %v1070 = vadd.f32 0.0, %v1069
        %v1071 = vpop.f32.mrf.mxu0
        %1072 = vmatprep.mubr.f32.mxu0 %v856
        %1073 = vmatmul.mubr.f32.gmra.mxu0 %v855
        %v1074 = vpop.f32.mrf.mxu0
        %v1075 = vadd.f32 0.0, %v1074
        %v1076 = vpop.f32.mrf.mxu0
        %1077 = vmatprep.mubr.f32.mxu0 %v860
        %1078 = vmatmul.mubr.f32.gmra.mxu0 %v859
        %v1079 = vpop.f32.mrf.mxu0
        %v1080 = vadd.f32 0.0, %v1079
        %v1081 = vpop.f32.mrf.mxu0
        %1082 = vmatprep.mubr.f32.mxu0 %v864
        %1083 = vmatmul.mubr.f32.gmra.mxu0 %v863
        %v1084 = vpop.f32.mrf.mxu0
        %v1085 = vadd.f32 0.0, %v1084
        %v1086 = vpop.f32.mrf.mxu0
        %1087 = vmatprep.mubr.f32.mxu0 %v868
        %1088 = vmatmul.mubr.f32.gmra.mxu0 %v867
        %v1089 = vpop.f32.mrf.mxu0
        %v1090 = vadd.f32 0.0, %v1089
        %v1091 = vpop.f32.mrf.mxu0
        %1092 = vmatprep.mubr.f32.mxu0 %v872
        %1093 = vmatmul.mubr.f32.gmra.mxu0 %v871
        %v1094 = vpop.f32.mrf.mxu0
        %v1095 = vadd.f32 0.0, %v1094
        %v1096 = vpop.f32.mrf.mxu0
        %1097 = vmatprep.mubr.f32.mxu0 %v876
        %1098 = vmatmul.mubr.f32.gmra.mxu0 %v875
        %v1099 = vpop.f32.mrf.mxu0
        %v1100 = vadd.f32 0.0, %v1099
        %v1101 = vpop.f32.mrf.mxu0
        %1102 = vmatprep.mubr.f32.mxu0 %v880
        %1103 = vmatmul.mubr.f32.gmra.mxu0 %v879
        %v1104 = vpop.f32.mrf.mxu0
        %v1105 = vadd.f32 0.0, %v1104
        %v1106 = vpop.f32.mrf.mxu0
        %1107 = vdwg.mxu0
        %1108 = vmatprep.subr.mxu0 0.0
        %1109 = vmatpush1.msra.mxu0 %v946
        %1110 = vmatprep.subr.mxu0 0.0
        %1111 = vmatpush1.msra.mxu0 %v945
        %1112 = vmatprep.subr.mxu0 0.0
        %1113 = vmatpush1.msra.mxu0 %v944
        %1114 = vmatprep.subr.mxu0 0.0
        %1115 = vmatpush1.msra.mxu0 %v943
        %1116 = vmatprep.subr.mxu0 0.0
        %1117 = vmatpush1.msra.mxu0 %v942
        %1118 = vmatprep.subr.mxu0 0.0
        %1119 = vmatpush1.msra.mxu0 %v941
        %1120 = vmatprep.subr.mxu0 0.0
        %1121 = vmatpush1.msra.mxu0 %v940
        %1122 = vmatprep.subr.mxu0 0.0
        %1123 = vmatpush1.msra.mxu0 %v939
        %1124 = vmatprep.subr.mxu0 0.0
        %1125 = vmatpush1.msra.mxu0 %v938
        %1126 = vmatprep.subr.mxu0 0.0
        %1127 = vmatpush1.msra.mxu0 %v937
        %1128 = vmatprep.subr.mxu0 0.0
        %1129 = vmatpush1.msra.mxu0 %v936
        %1130 = vmatprep.subr.mxu0 0.0
        %1131 = vmatpush1.msra.mxu0 %v935
        %1132 = vmatprep.subr.mxu0 0.0
        %1133 = vmatpush1.msra.mxu0 %v934
        %1134 = vmatprep.subr.mxu0 0.0
        %1135 = vmatpush1.msra.mxu0 %v933
        %1136 = vmatprep.subr.mxu0 0.0
        %1137 = vmatpush1.msra.mxu0 %v932
        %1138 = vmatprep.subr.mxu0 0.0
        %1139 = vmatpush1.msra.mxu0 %v931
        %1140 = vmatprep.subr.mxu0 0.0
        %1141 = vmatpush2.msra.mxu0 %v962
        %1142 = vmatprep.subr.mxu0 0.0
        %1143 = vmatpush2.msra.mxu0 %v961
        %1144 = vmatprep.subr.mxu0 0.0
        %1145 = vmatpush2.msra.mxu0 %v960
        %1146 = vmatprep.subr.mxu0 0.0
        %1147 = vmatpush2.msra.mxu0 %v959
        %1148 = vmatprep.subr.mxu0 0.0
        %1149 = vmatpush2.msra.mxu0 %v958
        %1150 = vmatprep.subr.mxu0 0.0
        %1151 = vmatpush2.msra.mxu0 %v957
        %1152 = vmatprep.subr.mxu0 0.0
        %1153 = vmatpush2.msra.mxu0 %v956
        %1154 = vmatprep.subr.mxu0 0.0
        %1155 = vmatpush2.msra.mxu0 %v955
        %1156 = vmatprep.subr.mxu0 0.0
        %1157 = vmatpush2.msra.mxu0 %v954
        %1158 = vmatprep.subr.mxu0 0.0
        %1159 = vmatpush2.msra.mxu0 %v953
        %1160 = vmatprep.subr.mxu0 0.0
        %1161 = vmatpush2.msra.mxu0 %v952
        %1162 = vmatprep.subr.mxu0 0.0
        %1163 = vmatpush2.msra.mxu0 %v951
        %1164 = vmatprep.subr.mxu0 0.0
        %1165 = vmatpush2.msra.mxu0 %v950
        %1166 = vmatprep.subr.mxu0 0.0
        %1167 = vmatpush2.msra.mxu0 %v949
        %1168 = vmatprep.subr.mxu0 0.0
        %1169 = vmatpush2.msra.mxu0 %v948
        %1170 = vmatprep.subr.mxu0 0.0
        %1171 = vmatpush2.msra.mxu0 %v947
        %1172 = vmatprep.mubr.f32.mxu0 %v822
        %1173 = vmatmul.mubr.f32.gmra.mxu0 %v821
        %v1174 = vpop.f32.mrf.mxu0
        %v1175 = vadd.f32 %v1030, %v1174
        %v1176 = vpop.f32.mrf.mxu0
        %1177 = vmatprep.mubr.f32.mxu0 %v826
        %1178 = vmatmul.mubr.f32.gmra.mxu0 %v825
        %v1179 = vpop.f32.mrf.mxu0
        %v1180 = vadd.f32 %v1035, %v1179
        %v1181 = vpop.f32.mrf.mxu0
        %1182 = vmatprep.mubr.f32.mxu0 %v830
        %1183 = vmatmul.mubr.f32.gmra.mxu0 %v829
        %v1184 = vpop.f32.mrf.mxu0
        %v1185 = vadd.f32 %v1040, %v1184
        %v1186 = vpop.f32.mrf.mxu0
        %1187 = vmatprep.mubr.f32.mxu0 %v834
        %1188 = vmatmul.mubr.f32.gmra.mxu0 %v833
        %v1189 = vpop.f32.mrf.mxu0
        %v1190 = vadd.f32 %v1045, %v1189
        %v1191 = vpop.f32.mrf.mxu0
        %1192 = vmatprep.mubr.f32.mxu0 %v838
        %1193 = vmatmul.mubr.f32.gmra.mxu0 %v837
        %v1194 = vpop.f32.mrf.mxu0
        %v1195 = vadd.f32 %v1050, %v1194
        %v1196 = vpop.f32.mrf.mxu0
        %1197 = vmatprep.mubr.f32.mxu0 %v842
        %1198 = vmatmul.mubr.f32.gmra.mxu0 %v841
        %v1199 = vpop.f32.mrf.mxu0
        %v1200 = vadd.f32 %v1055, %v1199
        %v1201 = vpop.f32.mrf.mxu0
        %1202 = vmatprep.mubr.f32.mxu0 %v846
        %1203 = vmatmul.mubr.f32.gmra.mxu0 %v845
        %v1204 = vpop.f32.mrf.mxu0
        %v1205 = vadd.f32 %v1060, %v1204
        %v1206 = vpop.f32.mrf.mxu0
        %1207 = vmatprep.mubr.f32.mxu0 %v850
        %1208 = vmatmul.mubr.f32.gmra.mxu0 %v849
        %v1209 = vpop.f32.mrf.mxu0
        %v1210 = vadd.f32 %v1065, %v1209
        %v1211 = vpop.f32.mrf.mxu0
        %1212 = vmatprep.mubr.f32.mxu0 %v854
        %1213 = vmatmul.mubr.f32.gmra.mxu0 %v853
        %v1214 = vpop.f32.mrf.mxu0
        %v1215 = vadd.f32 %v1070, %v1214
        %v1216 = vpop.f32.mrf.mxu0
        %1217 = vmatprep.mubr.f32.mxu0 %v858
        %1218 = vmatmul.mubr.f32.gmra.mxu0 %v857
        %v1219 = vpop.f32.mrf.mxu0
        %v1220 = vadd.f32 %v1075, %v1219
        %v1221 = vpop.f32.mrf.mxu0
        %1222 = vmatprep.mubr.f32.mxu0 %v862
        %1223 = vmatmul.mubr.f32.gmra.mxu0 %v861
        %v1224 = vpop.f32.mrf.mxu0
        %v1225 = vadd.f32 %v1080, %v1224
        %v1226 = vpop.f32.mrf.mxu0
        %1227 = vmatprep.mubr.f32.mxu0 %v866
        %1228 = vmatmul.mubr.f32.gmra.mxu0 %v865
        %v1229 = vpop.f32.mrf.mxu0
        %v1230 = vadd.f32 %v1085, %v1229
        %v1231 = vpop.f32.mrf.mxu0
        %1232 = vmatprep.mubr.f32.mxu0 %v870
        %1233 = vmatmul.mubr.f32.gmra.mxu0 %v869
        %v1234 = vpop.f32.mrf.mxu0
        %v1235 = vadd.f32 %v1090, %v1234
        %v1236 = vpop.f32.mrf.mxu0
        %1237 = vmatprep.mubr.f32.mxu0 %v874
        %1238 = vmatmul.mubr.f32.gmra.mxu0 %v873
        %v1239 = vpop.f32.mrf.mxu0
        %v1240 = vadd.f32 %v1095, %v1239
        %v1241 = vpop.f32.mrf.mxu0
        %1242 = vmatprep.mubr.f32.mxu0 %v878
        %1243 = vmatmul.mubr.f32.gmra.mxu0 %v877
        %v1244 = vpop.f32.mrf.mxu0
        %v1245 = vadd.f32 %v1100, %v1244
        %v1246 = vpop.f32.mrf.mxu0
        %1247 = vmatprep.mubr.f32.mxu0 %v882
        %1248 = vmatmul.mubr.f32.gmra.mxu0 %v881
        %v1249 = vpop.f32.mrf.mxu0
        %v1250 = vadd.f32 %v1105, %v1249
        %v1251 = vpop.f32.mrf.mxu0
        %1252 = vdwg.mxu0
        %v1253 = vadd.f32 %v883, %v1175
        %v1254 = vadd.f32 %v884, %v1180
        %v1255 = vadd.f32 %v885, %v1185
        %v1256 = vadd.f32 %v886, %v1190
        %v1257 = vadd.f32 %v887, %v1195
        %v1258 = vadd.f32 %v888, %v1200
        %v1259 = vadd.f32 %v889, %v1205
        %v1260 = vadd.f32 %v890, %v1210
        %v1261 = vadd.f32 %v891, %v1215
        %v1262 = vadd.f32 %v892, %v1220
        %v1263 = vadd.f32 %v893, %v1225
        %v1264 = vadd.f32 %v894, %v1230
        %v1265 = vadd.f32 %v895, %v1235
        %v1266 = vadd.f32 %v896, %v1240
        %v1267 = vadd.f32 %v897, %v1245
        %v1268 = vadd.f32 %v898, %v1250
        %1269 = vst [vmem:[#allocation2] sm:$0xff] %v1253
        %1270 = vst [vmem:[#allocation2 + $0x8] sm:$0xff] %v1254
        %1271 = vst [vmem:[#allocation2 + $0x10] sm:$0xff] %v1255
        %1272 = vst [vmem:[#allocation2 + $0x18] sm:$0xff] %v1256
        %1273 = vst [vmem:[#allocation2 + $0x20] sm:$0xff] %v1257
        %1274 = vst [vmem:[#allocation2 + $0x28] sm:$0xff] %v1258
        %1275 = vst [vmem:[#allocation2 + $0x30] sm:$0xff] %v1259
        %1276 = vst [vmem:[#allocation2 + $0x38] sm:$0xff] %v1260
        %1277 = vst [vmem:[#allocation2 + $0x40] sm:$0xff] %v1261
        %1278 = vst [vmem:[#allocation2 + $0x48] sm:$0xff] %v1262
        %1279 = vst [vmem:[#allocation2 + $0x50] sm:$0xff] %v1263
        %1280 = vst [vmem:[#allocation2 + $0x58] sm:$0xff] %v1264
        %1281 = vst [vmem:[#allocation2 + $0x60] sm:$0xff] %v1265
        %1282 = vst [vmem:[#allocation2 + $0x68] sm:$0xff] %v1266
        %1283 = vst [vmem:[#allocation2 + $0x70] sm:$0xff] %v1267
        %1284 = vst [vmem:[#allocation2 + $0x78] sm:$0xff] %v1268
        %p1285 = scmp.eq.s32.totalorder %s33, 1
        // Predicated region
        $region61: #{tpu_custom_call.1} parent=39 // pred_check
          %p1286 = pneg %p1285
        $region62: #{tpu_custom_call.1} parent=39 // pred_check_branch
          %1288 = sbr.rel (%p1286) target = $region64
        $region63: #{tpu_custom_call.1} parent=39 // pred_region
          %v1289 = vld [vmem:[#allocation2] sm:$0xff]
          %v1290 = vld [vmem:[#allocation2 + $0x8] sm:$0xff]
          %v1291 = vld [vmem:[#allocation2 + $0x10] sm:$0xff]
          %v1292 = vld [vmem:[#allocation2 + $0x18] sm:$0xff]
          %v1293 = vld [vmem:[#allocation2 + $0x20] sm:$0xff]
          %v1294 = vld [vmem:[#allocation2 + $0x28] sm:$0xff]
          %v1295 = vld [vmem:[#allocation2 + $0x30] sm:$0xff]
          %v1296 = vld [vmem:[#allocation2 + $0x38] sm:$0xff]
          %v1297 = vld [vmem:[#allocation2 + $0x40] sm:$0xff]
          %v1298 = vld [vmem:[#allocation2 + $0x48] sm:$0xff]
          %v1299 = vld [vmem:[#allocation2 + $0x50] sm:$0xff]
          %v1300 = vld [vmem:[#allocation2 + $0x58] sm:$0xff]
          %v1301 = vld [vmem:[#allocation2 + $0x60] sm:$0xff]
          %v1302 = vld [vmem:[#allocation2 + $0x68] sm:$0xff]
          %v1303 = vld [vmem:[#allocation2 + $0x70] sm:$0xff]
          %v1304 = vld [vmem:[#allocation2 + $0x78] sm:$0xff]
          %v1305 = vld [vmem:[%s4] sm:$0x1]
          %v1307 = vlaneseq
          %v1308 = vshrl.u32 %v1307, 7
          %v1309 = vsub.s32 0, %v1308
          %v1310 = vrot.slane %v1305, %v1309
          %v1312 = vadd.f32 %v1289, %v1310
          %v1313 = vadd.f32 %v1290, %v1310
          %v1314 = vadd.f32 %v1291, %v1310
          %v1315 = vadd.f32 %v1292, %v1310
          %v1316 = vadd.f32 %v1293, %v1310
          %v1317 = vadd.f32 %v1294, %v1310
          %v1318 = vadd.f32 %v1295, %v1310
          %v1319 = vadd.f32 %v1296, %v1310
          %v1320 = vadd.f32 %v1297, %v1310
          %v1321 = vadd.f32 %v1298, %v1310
          %v1322 = vadd.f32 %v1299, %v1310
          %v1323 = vadd.f32 %v1300, %v1310
          %v1324 = vadd.f32 %v1301, %v1310
          %v1325 = vadd.f32 %v1302, %v1310
          %v1326 = vadd.f32 %v1303, %v1310
          %v1327 = vadd.f32 %v1304, %v1310
          %1328 = vst [vmem:[%s369] sm:$0xff] %v1312
          %1329 = vst [vmem:[%s369 + $0x8] sm:$0xff] %v1313
          %1330 = vst [vmem:[%s369 + $0x10] sm:$0xff] %v1314
          %1331 = vst [vmem:[%s369 + $0x18] sm:$0xff] %v1315
          %1332 = vst [vmem:[%s369 + $0x20] sm:$0xff] %v1316
          %1333 = vst [vmem:[%s369 + $0x28] sm:$0xff] %v1317
          %1334 = vst [vmem:[%s369 + $0x30] sm:$0xff] %v1318
          %1335 = vst [vmem:[%s369 + $0x38] sm:$0xff] %v1319
          %1336 = vst [vmem:[%s369 + $0x40] sm:$0xff] %v1320
          %1337 = vst [vmem:[%s369 + $0x48] sm:$0xff] %v1321
          %1338 = vst [vmem:[%s369 + $0x50] sm:$0xff] %v1322
          %1339 = vst [vmem:[%s369 + $0x58] sm:$0xff] %v1323
          %1340 = vst [vmem:[%s369 + $0x60] sm:$0xff] %v1324
          %1341 = vst [vmem:[%s369 + $0x68] sm:$0xff] %v1325
          %1342 = vst [vmem:[%s369 + $0x70] sm:$0xff] %v1326
          %1343 = vst [vmem:[%s369 + $0x78] sm:$0xff] %v1327
        $region64: #{tpu_custom_call.1} parent=39 // pred_fallthru
          _
        %s1344 = sand.u32 %s173, 1
        %s1345 = scalar_lea.sflag [#allocation5], %s1344
        %s1346 = sand.u32 %s173, 1
        %s1347 = smul.addr %s1346, 128
        %s1348 = scalar_lea.vmem [#allocation11], %s1347
        // Predicated region
        $region65: #{tpu_custom_call.1} parent=39 // pred_check
          %p1349 = pneg %p183
        $region66: #{tpu_custom_call.1} parent=39 // pred_check_branch
          %1351 = sbr.rel (%p1349) target = $region68
        $region67: #{tpu_custom_call.1} parent=39 // pred_region
          %s1352 = smul.u32 16, %s32
          %s1354 = ssub.s32 2048, 2048
          %1355 = vsyncadd %s1345, %s1354
          %s1356 = smul.addr %s1352, 128
          %s1357 = scalar_lea.hbm %s5, %s1356
          %s1358 = sshll.u32 %s1348, 4
          %s1359 = int_to_ptr.vmem [resolvable:$true] %s1358
          %1364 = dma.vmem_to_hbm [thread:$0]  %s1359, 2048, %s1357, %s1345, 128, 128, 8
        $region68: #{tpu_custom_call.1} parent=39 // pred_fallthru
          _
      $region40: #{tpu_custom_call.1} parent=5 // pred_fallthru
        _
      %p1365 = scmp.le.s32.totalorder 2, %s23
      // Predicated region
      $region69: #{tpu_custom_call.1} parent=5 // pred_check
        %p1366 = pneg %p1365
      $region70: #{tpu_custom_call.1} parent=5 // pred_check_branch
        %1368 = sbr.rel (%p1366) target = $region72
      $region71: #{tpu_custom_call.1} parent=5 // pred_region
        %s1369 = ssub.s32 %s23, 2
        // Predicated region
        $region73: #{tpu_custom_call.1} parent=71 // pred_check
          %p1370 = pneg %p189
        $region74: #{tpu_custom_call.1} parent=71 // pred_check_branch
          %1372 = sbr.rel (%p1370) target = $region76
        $region75: #{tpu_custom_call.1} parent=71 // pred_region
          %s1373 = sand.u32 %s174, 1
          %s1374 = scalar_lea.sflag [#allocation5], %s1373
          %s1375 = sand.u32 %s174, 1
          %s1376 = smul.addr %s1375, 128
          %s1377 = scalar_lea.vmem [#allocation11], %s1376
          %1378 = dma.done %s1374, 2048
        $region76: #{tpu_custom_call.1} parent=71 // pred_fallthru
          _
      $region72: #{tpu_custom_call.1} parent=5 // pred_fallthru
        _
    $region6: #{tpu_custom_call.1} parent=1 // loop_footer
      %s27 = sadd.s32 1, %s23
    $region7: #{tpu_custom_call.1} parent=1 // loop_footer_branch
      %22 = sbr.rel target = $region3
    $region8: #{tpu_custom_call.1} parent=1 // loop_exit
      _
    %1379 = vsyncpa [#allocation4], 1
    %s1380 = scalar_lea.sflag [#allocation4], 1
    %1381 = vsyncpa %s1380, 1
    %1382 = vsyncpa [#allocation7], 1
    %s1383 = scalar_lea.sflag [#allocation7], 1
    %1384 = vsyncpa %s1383, 1
    %1385 = vsyncpa [#allocation10], 1
    %s1386 = scalar_lea.sflag [#allocation10], 1
    %1387 = vsyncpa %s1386, 1
    %1388 = vsyncpa [#allocation5], 1
    %s1389 = scalar_lea.sflag [#allocation5], 1
    %1390 = vsyncpa %s1389, 1

</llo_original>
